<compile_context>
chip_gen: v7x
topology: tpu7x:2x2x1
jax: 0.10.0
libtpu: 0.0.40
codegen_flags: <defaults>
</compile_context>

<pallas_src>
import functools
import math

import jax
import jax.numpy as jnp
from jax.experimental import pallas as pl
from jax.experimental.pallas import tpu as pltpu

LANE = 128


def _round_up(x, m):
    return ((x + m - 1) // m) * m


def _vmem_limit_bytes():
    """~3/4 of physical VMEM (96 MiB on v5e/v6e, 48 MiB on v7x per TC).
    Falls back to the v7x-safe 48 MiB if the hardware query is unavailable."""
    cap = 64 * 1024 * 1024
    try:
        info = pltpu.get_tpu_info()
        cap = int(getattr(info, "vmem_capacity_bytes", cap))
    except Exception:
        pass
    return (cap * 3) // 4


def _pick_tiles(n_pad, d_pad, dout_pad, const_bytes, budget):
    """Largest (tile_n, tile_k) -- power-of-two multiples of 128, capped at
    (1024, 2048) and at the padded node count -- whose *total* VMEM footprint
    (double-buffered adj / x / output streams, f32 accumulator scratch and the
    resident MLP weights) fits `budget`."""
    def footprint(tn, tk):
        return (2 * tn * tk * 2            # adjacency tile, bf16, double-buffered
                + 2 * tk * d_pad * 2       # x k-stream tile, bf16, double-buffered
                + 2 * tn * d_pad * 2       # x residual row tile, bf16, double-buffered
                + 2 * tn * dout_pad * 4    # f32 output tile, double-buffered
                + tn * d_pad * 4           # f32 aggregation accumulator (scratch)
                + const_bytes)             # MLP weights / biases (double-buffered)

    n_cands = [t for t in (1024, 512, 256, 128) if t <= n_pad] or [LANE]
    k_cands = [t for t in (2048, 1024, 512, 256, 128) if t <= n_pad] or [LANE]
    for tn in n_cands:
        for tk in k_cands:
            if footprint(tn, tk) <= budget:
                return tn, tk
    return LANE, LANE


def gine_kernel(eps_ref, adj_ref, xk_ref, xi_ref, w1_ref, b1_ref, w2_ref,
                b2_ref, out_ref, acc_ref, *, deg_col):
    # eps_ref : (1,)              f32  (SMEM scalar)
    # adj_ref : (TILE_N, TILE_K)  bf16 block of adj_t (adj_t[v, u] = 1 iff edge u->v)
    # xk_ref  : (TILE_K, D_pad)   bf16 k-tile of node features (+ ones column at deg_col)
    # xi_ref  : (TILE_N, D_pad)   bf16 row tile of node features (residual path)
    # w1/b1   : (D_pad, H_pad) bf16 / (1, H_pad) f32
    # w2/b2   : (H_pad, Dout_pad) bf16 / (1, Dout_pad) f32
    # out_ref : (TILE_N, Dout_pad) f32 (lane-dense)
    # acc_ref : (TILE_N, D_pad)   f32 aggregation accumulator (VMEM scratch)
    k = pl.program_id(1)

    @pl.when(k == 0)
    def _():
        acc_ref[...] = jnp.zeros_like(acc_ref)

    # Partial neighbor-sum for this k tile: bf16 MXU matmul, f32 accumulation.
    # The ones column at `deg_col` makes the in-degree fall out of the same matmul.
    acc_ref[...] += jnp.dot(adj_ref[...], xk_ref[...],
                            preferred_element_type=jnp.float32)

    @pl.when(k == pl.num_programs(1) - 1)
    def _():
        acc = acc_ref[...]
        deg = acc[:, deg_col:deg_col + 1]                              # exact f32 in-degree
        inv_deg = pl.reciprocal(jnp.maximum(deg, 1.0), approx=True)    # EUP slot
        agg = acc * inv_deg                                            # mean aggregation

        eps = eps_ref[0]
        h = (1.0 + eps) * xi_ref[...].astype(jnp.float32) + agg        # f32 epilogue

        # apply_func MLP: Linear -> ReLU -> Linear (bf16 MXU operands, f32 acc).
        h1 = jnp.dot(h.astype(jnp.bfloat16), w1_ref[...],
                     preferred_element_type=jnp.float32) + b1_ref[...]
        h1 = jnp.maximum(h1, 0.0)
        out = jnp.dot(h1.astype(jnp.bfloat16), w2_ref[...],
                      preferred_element_type=jnp.float32) + b2_ref[...]
        out_ref[...] = out.astype(out_ref.dtype)


def graph_gine_forward(adj_t, node_feat, coord_feat, edge_feat, params, *,
                       tile_n=None, tile_k=None):
    """Pallas implementation of the graph-conv + node-MLP core.

    Returns (adj_t, hx, coord_feat, edge_feat), mirroring (g, hx, coord_feat, edge_feat).
    """
    eps, w1, b1, w2, b2 = (params["eps"], params["w1"], params["b1"],
                           params["w2"], params["b2"])
    N, D = node_feat.shape
    H = w1.shape[1]
    D_OUT = w2.shape[1]

    # Lane-dense feature padding; one extra column (index D) carries the ones
    # vector so the in-degree comes out of the aggregation matmul for free.
    d_pad = _round_up(D + 1, LANE)
    h_pad = _round_up(H, LANE)
    dout_pad = _round_up(D_OUT, LANE)
    n_pad = _round_up(N, LANE)

    vmem_limit = _vmem_limit_bytes()
    const_bytes = (2 * (d_pad * h_pad + h_pad * dout_pad) * 2
                   + 2 * (h_pad + dout_pad) * 4)
    if tile_n is None or tile_k is None:
        tn, tk = _pick_tiles(n_pad, d_pad, dout_pad, const_bytes,
                             int(vmem_limit * 0.85))
        tile_n = tn if tile_n is None else tile_n
        tile_k = tk if tile_k is None else tile_k
    assert tile_n % LANE == 0 and tile_k % LANE == 0, "tiles must be multiples of 128"
    n_pad = _round_up(n_pad, math.lcm(tile_n, tile_k))
    grid = (n_pad // tile_n, n_pad // tile_k)

    bf16 = jnp.bfloat16
    f32 = jnp.float32

    # Cast to bf16 *before* padding: no f32 N_pad^2 temp, exact for 0/1 edges.
    adj_p = jnp.pad(adj_t.astype(bf16), ((0, n_pad - N), (0, n_pad - N)))

    # Single padded bf16 copy of x, shared by the aggregation (k-stream) and the
    # residual (row-stream) inputs.  Column D is the all-ones degree column.
    x_p = jnp.zeros((n_pad, d_pad), dtype=bf16)
    x_p = x_p.at[:N, :D].set(node_feat.astype(bf16))
    x_p = x_p.at[:, D].set(1.0)

    w1_p = jnp.zeros((d_pad, h_pad), dtype=bf16).at[:D, :H].set(w1.astype(bf16))
    b1_p = jnp.zeros((1, h_pad), dtype=f32).at[:, :H].set(b1.astype(f32))
    w2_p = jnp.zeros((h_pad, dout_pad), dtype=bf16).at[:H, :D_OUT].set(w2.astype(bf16))
    b2_p = jnp.zeros((1, dout_pad), dtype=f32).at[:, :D_OUT].set(b2.astype(f32))
    eps_f32 = eps.astype(f32).reshape((1,))

    flops = (2 * n_pad * n_pad * d_pad
             + 2 * n_pad * (d_pad * h_pad + h_pad * dout_pad))
    bytes_accessed = (n_pad * n_pad * 2                 # adjacency (bf16)
                      + grid[0] * n_pad * d_pad * 2     # x k-stream, re-read per row tile
                      + n_pad * d_pad * 2               # x residual rows
                      + n_pad * dout_pad * 4            # f32 output
                      + const_bytes)
    cost = pl.CostEstimate(flops=int(flops), transcendentals=int(n_pad),
                           bytes_accessed=int(bytes_accessed))

    kernel = functools.partial(gine_kernel, deg_col=D)

    out_p = pl.pallas_call(
        kernel,
        out_shape=jax.ShapeDtypeStruct((n_pad, dout_pad), jnp.float32),
        grid_spec=pltpu.PrefetchScalarGridSpec(
            num_scalar_prefetch=0,
            grid=grid,
            in_specs=[
                pl.BlockSpec(memory_space=pltpu.MemorySpace.SMEM),       # eps (scalar)
                pl.BlockSpec((tile_n, tile_k), lambda i, k: (i, k)),     # adj block (bf16)
                pl.BlockSpec((tile_k, d_pad), lambda i, k: (k, 0)),      # x, k-stream (bf16)
                pl.BlockSpec((tile_n, d_pad), lambda i, k: (i, 0)),      # x, residual rows (bf16)
                pl.BlockSpec((d_pad, h_pad), lambda i, k: (0, 0)),       # w1 (bf16)
                pl.BlockSpec((1, h_pad), lambda i, k: (0, 0)),           # b1 (f32)
                pl.BlockSpec((h_pad, dout_pad), lambda i, k: (0, 0)),    # w2 (bf16)
                pl.BlockSpec((1, dout_pad), lambda i, k: (0, 0)),        # b2 (f32)
            ],
            out_specs=pl.BlockSpec((tile_n, dout_pad), lambda i, k: (i, 0)),
            scratch_shapes=[pltpu.VMEM((tile_n, d_pad), jnp.float32)],   # agg accumulator
        ),
        compiler_params=pltpu.CompilerParams(
            dimension_semantics=("parallel", "arbitrary"),   # row tiles shard across TCs (v7x)
            vmem_limit_bytes=int(vmem_limit),
        ),
        cost_estimate=cost,
    )(eps_f32, adj_p, x_p, x_p, w1_p, b1_p, w2_p, b2_p)

    hx = out_p[:N, :D_OUT]
    return adj_t, hx, coord_feat, edge_feat


def reference_forward(adj_t, node_feat, params):
    """Pure-JAX f32 reference for the correctness check."""
    eps, w1, b1, w2, b2 = (params["eps"], params["w1"], params["b1"],
                           params["w2"], params["b2"])
    deg = jnp.maximum(adj_t.sum(axis=-1, keepdims=True), 1.0)
    agg = (adj_t @ node_feat) / deg
    h = (1.0 + eps[0]) * node_feat + agg
    h1 = jnp.maximum(h @ w1 + b1, 0.0)
    return h1 @ w2 + b2


if __name__ == "__main__":
    key = jax.random.PRNGKey(0)
    k_adj, k_x, k_coord, k_edge, k_w1, k_b1, k_w2, k_b2 = jax.random.split(key, 8)

    N = 256       # number of nodes
    D = 32        # node feature dim
    H = 64        # hidden dim of apply_func MLP
    D_OUT = 32    # output dim of apply_func MLP

    # Synthetic directed graph as dense adjacency (adj[u, v] = 1 iff edge u->v).
    adj = (jax.random.uniform(k_adj, (N, N)) < 0.15).astype(jnp.float32)
    adj = adj * (1.0 - jnp.eye(N, dtype=jnp.float32))   # no self loops
    adj_t = adj.T                                        # adj_t[v, u]: in-neighbors of v
    num_edges = int(adj.sum())
    E = max(num_edges, 1)

    node_feat = jax.random.normal(k_x, (N, D), dtype=jnp.float32)
    coord_feat = jax.random.normal(k_coord, (N, 3), dtype=jnp.float32)
    edge_feat = jax.random.normal(k_edge, (E, 8), dtype=jnp.float32)

    params = {
        "eps": jnp.zeros((1,), dtype=jnp.float32),
        "w1": jax.random.normal(k_w1, (D, H), dtype=jnp.float32) * (1.0 / jnp.sqrt(D)),
        "b1": jax.random.normal(k_b1, (1, H), dtype=jnp.float32) * 0.01,
        "w2": jax.random.normal(k_w2, (H, D_OUT), dtype=jnp.float32) * (1.0 / jnp.sqrt(H)),
        "b2": jax.random.normal(k_b2, (1, D_OUT), dtype=jnp.float32) * 0.01,
    }

    # tile_n = tile_k = 128 -> 2x2 grid even at this small N (exercises the K-tiled,
    # accumulator + pl.when epilogue path).  At real sizes the picker chooses up to
    # (1024, 2048) against the per-generation VMEM budget.
    g_out, hx, coord_out, edge_out = graph_gine_forward(
        adj_t, node_feat, coord_feat, edge_feat, params, tile_n=128, tile_k=128)
    hx = jax.block_until_ready(hx)

    ref = reference_forward(adj_t, node_feat, params)
    assert hx.shape == (N, D_OUT)
    # bf16 MXU operands / bf16 residual / approx reciprocal vs pure-f32 reference.
    max_err = float(jnp.max(jnp.abs(hx - ref)))
    assert max_err < 1e-1, f"mismatch vs pure-JAX reference (max abs err {max_err})"

    print("KERNEL_OK")
</pallas_src>

<mosaic_0001>
module attributes {stable_mosaic.version = 11 : i64} {
  func.func @gine_kernel(%arg0: i32, %arg1: i32, %arg2: memref<1xf32, #tpu.memory_space<smem>>, %arg3: memref<128x128xbf16, #tpu.memory_space<vmem>>, %arg4: memref<128x128xbf16, #tpu.memory_space<vmem>>, %arg5: memref<128x128xbf16, #tpu.memory_space<vmem>>, %arg6: memref<128x128xbf16, #tpu.memory_space<vmem>>, %arg7: memref<1x128xf32, #tpu.memory_space<vmem>>, %arg8: memref<128x128xbf16, #tpu.memory_space<vmem>>, %arg9: memref<1x128xf32, #tpu.memory_space<vmem>>, %arg10: memref<128x128xf32, #tpu.memory_space<vmem>>, %arg11: memref<128x128xf32, #tpu.memory_space<vmem>>) attributes {dimension_semantics = [#tpu.dimension_semantics<parallel>, #tpu.dimension_semantics<arbitrary>], iteration_bounds = array<i64: 2, 2>, scalar_prefetch = 0 : i64, scratch_operands = 1 : i64, tpu.core_type = #tpu.core_type<tc>, window_params = [{transform_indices = @transform_0, window_bounds = array<i64: 1>}, {transform_indices = @transform_1, window_bounds = array<i64: 128, 128>}, {transform_indices = @transform_2, window_bounds = array<i64: 128, 128>}, {transform_indices = @transform_3, window_bounds = array<i64: 128, 128>}, {pipeline_mode = #tpu.pipeline_mode<synchronous>, transform_indices = @transform_4, window_bounds = array<i64: 128, 128>}, {pipeline_mode = #tpu.pipeline_mode<synchronous>, transform_indices = @transform_5, window_bounds = array<i64: 1, 128>}, {pipeline_mode = #tpu.pipeline_mode<synchronous>, transform_indices = @transform_6, window_bounds = array<i64: 128, 128>}, {pipeline_mode = #tpu.pipeline_mode<synchronous>, transform_indices = @transform_7, window_bounds = array<i64: 1, 128>}, {transform_indices = @transform_8, window_bounds = array<i64: 128, 128>}]} {
    %c0_i32 = arith.constant 0 : i32
    %0 = arith.cmpi eq, %arg1, %c0_i32 : i32
    %1 = arith.extui %0 : i1 to i32
    %c0_i32_0 = arith.constant 0 : i32
    %2 = arith.cmpi ne, %1, %c0_i32_0 : i32
    scf.if %2 {
      %cst_9 = arith.constant 0.000000e+00 : f32
      %12 = vector.broadcast %cst_9 : f32 to vector<128x128xf32>
      %c0_10 = arith.constant 0 : index
      %c0_11 = arith.constant 0 : index
      %13 = vector.load %arg11[%c0_10, %c0_11] : memref<128x128xf32, #tpu.memory_space<vmem>>, vector<128x128xf32>
      tpu.vector_store %arg11[%c0_10, %c0_11], %12 {strides = array<i32>} : memref<128x128xf32, #tpu.memory_space<vmem>>, vector<128x128xf32>,
    } else {
    }
    %c0 = arith.constant 0 : index
    %c0_1 = arith.constant 0 : index
    %3 = vector.load %arg11[%c0, %c0_1] : memref<128x128xf32, #tpu.memory_space<vmem>>, vector<128x128xf32>
    %c0_2 = arith.constant 0 : index
    %c0_3 = arith.constant 0 : index
    %4 = vector.load %arg3[%c0_2, %c0_3] : memref<128x128xbf16, #tpu.memory_space<vmem>>, vector<128x128xbf16>
    %c0_4 = arith.constant 0 : index
    %c0_5 = arith.constant 0 : index
    %5 = vector.load %arg4[%c0_4, %c0_5] : memref<128x128xbf16, #tpu.memory_space<vmem>>, vector<128x128xbf16>
    %cst = arith.constant dense<0.000000e+00> : vector<128x128xf32>
    %6 = tpu.matmul %4, %5, %cst {dimension_numbers = #tpu.dot_dimension_numbers<[1], [0], [0], [1], [0, 0, 1, 1], [], []>} : vector<128x128xbf16>, vector<128x128xbf16>, vector<128x128xf32> -> vector<128x128xf32>
    %7 = arith.addf %3, %6 : vector<128x128xf32>
    %c0_6 = arith.constant 0 : index
    %c0_7 = arith.constant 0 : index
    %8 = vector.load %arg11[%c0_6, %c0_7] : memref<128x128xf32, #tpu.memory_space<vmem>>, vector<128x128xf32>
    tpu.vector_store %arg11[%c0_6, %c0_7], %7 {strides = array<i32>} : memref<128x128xf32, #tpu.memory_space<vmem>>, vector<128x128xf32>,
    %c1_i32 = arith.constant 1 : i32
    %9 = arith.cmpi eq, %arg1, %c1_i32 : i32
    %10 = arith.extui %9 : i1 to i32
    %c0_i32_8 = arith.constant 0 : i32
    %11 = arith.cmpi ne, %10, %c0_i32_8 : i32
    scf.if %11 {
      %c0_9 = arith.constant 0 : index
      %c0_10 = arith.constant 0 : index
      %12 = vector.load %arg11[%c0_9, %c0_10] : memref<128x128xf32, #tpu.memory_space<vmem>>, vector<128x128xf32>
      %13 = vector.extract_strided_slice %12 {offsets = [0, 32], sizes = [128, 1], strides = [1, 1]} : vector<128x128xf32> to vector<128x1xf32>
      %cst_11 = arith.constant 1.000000e+00 : f32
      %14 = vector.broadcast %cst_11 : f32 to vector<128x1xf32>
      %15 = arith.maximumf %13, %14 : vector<128x1xf32>
      %16 = tpu.reciprocal %15 {approx = true} : vector<128x1xf32> -> vector<128x1xf32>
      %17 = vector.broadcast %16 : vector<128x1xf32> to vector<128x128xf32>
      %18 = arith.mulf %12, %17 : vector<128x128xf32>
      %c0_12 = arith.constant 0 : index
      %19 = memref.load %arg2[%c0_12] : memref<1xf32, #tpu.memory_space<smem>>
      %cst_13 = arith.constant 1.000000e+00 : f32
      %20 = arith.addf %cst_13, %19 : f32
      %c0_14 = arith.constant 0 : index
      %c0_15 = arith.constant 0 : index
      %21 = vector.load %arg5[%c0_14, %c0_15] : memref<128x128xbf16, #tpu.memory_space<vmem>>, vector<128x128xbf16>
      %22 = arith.extf %21 : vector<128x128xbf16> to vector<128x128xf32>
      %23 = vector.broadcast %20 : f32 to vector<128x128xf32>
      %24 = arith.mulf %23, %22 : vector<128x128xf32>
      %25 = arith.addf %24, %18 : vector<128x128xf32>
      %26 = arith.truncf %25 : vector<128x128xf32> to vector<128x128xbf16>
      %c0_16 = arith.constant 0 : index
      %c0_17 = arith.constant 0 : index
      %27 = vector.load %arg6[%c0_16, %c0_17] : memref<128x128xbf16, #tpu.memory_space<vmem>>, vector<128x128xbf16>
      %cst_18 = arith.constant dense<0.000000e+00> : vector<128x128xf32>
      %28 = tpu.matmul %26, %27, %cst_18 {dimension_numbers = #tpu.dot_dimension_numbers<[1], [0], [0], [1], [0, 0, 1, 1], [], []>} : vector<128x128xbf16>, vector<128x128xbf16>, vector<128x128xf32> -> vector<128x128xf32>
      %c0_19 = arith.constant 0 : index
      %c0_20 = arith.constant 0 : index
      %29 = vector.load %arg7[%c0_19, %c0_20] : memref<1x128xf32, #tpu.memory_space<vmem>>, vector<1x128xf32>
      %30 = vector.broadcast %29 : vector<1x128xf32> to vector<128x128xf32>
      %31 = arith.addf %28, %30 : vector<128x128xf32>
      %cst_21 = arith.constant 0.000000e+00 : f32
      %32 = vector.broadcast %cst_21 : f32 to vector<128x128xf32>
      %33 = arith.maximumf %31, %32 : vector<128x128xf32>
      %34 = arith.truncf %33 : vector<128x128xf32> to vector<128x128xbf16>
      %c0_22 = arith.constant 0 : index
      %c0_23 = arith.constant 0 : index
      %35 = vector.load %arg8[%c0_22, %c0_23] : memref<128x128xbf16, #tpu.memory_space<vmem>>, vector<128x128xbf16>
      %cst_24 = arith.constant dense<0.000000e+00> : vector<128x128xf32>
      %36 = tpu.matmul %34, %35, %cst_24 {dimension_numbers = #tpu.dot_dimension_numbers<[1], [0], [0], [1], [0, 0, 1, 1], [], []>} : vector<128x128xbf16>, vector<128x128xbf16>, vector<128x128xf32> -> vector<128x128xf32>
      %c0_25 = arith.constant 0 : index
      %c0_26 = arith.constant 0 : index
      %37 = vector.load %arg9[%c0_25, %c0_26] : memref<1x128xf32, #tpu.memory_space<vmem>>, vector<1x128xf32>
      %38 = vector.broadcast %37 : vector<1x128xf32> to vector<128x128xf32>
      %39 = arith.addf %36, %38 : vector<128x128xf32>
      %c0_27 = arith.constant 0 : index
      %c0_28 = arith.constant 0 : index
      %40 = vector.load %arg10[%c0_27, %c0_28] : memref<128x128xf32, #tpu.memory_space<vmem>>, vector<128x128xf32>
      tpu.vector_store %arg10[%c0_27, %c0_28], %39 {strides = array<i32>} : memref<128x128xf32, #tpu.memory_space<vmem>>, vector<128x128xf32>,
    } else {
    }
    return
  }
  func.func @transform_0(%arg0: i32, %arg1: i32) -> i32 {
    %c0_i32 = arith.constant 0 : i32
    %c0_i32_0 = arith.constant 0 : i32
    return %c0_i32 : i32
  }
  func.func @transform_1(%arg0: i32, %arg1: i32) -> (i32, i32) {
    %c0_i32 = arith.constant 0 : i32
    return %arg0, %arg1 : i32, i32
  }
  func.func @transform_2(%arg0: i32, %arg1: i32) -> (i32, i32) {
    %c0_i32 = arith.constant 0 : i32
    %c0_i32_0 = arith.constant 0 : i32
    return %arg1, %c0_i32 : i32, i32
  }
  func.func @transform_3(%arg0: i32, %arg1: i32) -> (i32, i32) {
    %c0_i32 = arith.constant 0 : i32
    %c0_i32_0 = arith.constant 0 : i32
    return %arg0, %c0_i32 : i32, i32
  }
  func.func @transform_4(%arg0: i32, %arg1: i32) -> (i32, i32) {
    %c0_i32 = arith.constant 0 : i32
    %c0_i32_0 = arith.constant 0 : i32
    %c0_i32_1 = arith.constant 0 : i32
    return %c0_i32, %c0_i32_0 : i32, i32
  }
  func.func @transform_5(%arg0: i32, %arg1: i32) -> (i32, i32) {
    %c0_i32 = arith.constant 0 : i32
    %c0_i32_0 = arith.constant 0 : i32
    %c0_i32_1 = arith.constant 0 : i32
    return %c0_i32, %c0_i32_0 : i32, i32
  }
  func.func @transform_6(%arg0: i32, %arg1: i32) -> (i32, i32) {
    %c0_i32 = arith.constant 0 : i32
    %c0_i32_0 = arith.constant 0 : i32
    %c0_i32_1 = arith.constant 0 : i32
    return %c0_i32, %c0_i32_0 : i32, i32
  }
  func.func @transform_7(%arg0: i32, %arg1: i32) -> (i32, i32) {
    %c0_i32 = arith.constant 0 : i32
    %c0_i32_0 = arith.constant 0 : i32
    %c0_i32_1 = arith.constant 0 : i32
    return %c0_i32, %c0_i32_0 : i32, i32
  }
  func.func @transform_8(%arg0: i32, %arg1: i32) -> (i32, i32) {
    %c0_i32 = arith.constant 0 : i32
    %c0_i32_0 = arith.constant 0 : i32
    return %arg0, %c0_i32 : i32, i32
  }
}

</mosaic_0001>

<llo_original>
// kernel: tpu_custom_call.1
$region0: #{tpu_custom_call.1}
  #allocation0 [shape = 'u32[]', space=smem, size = 0x4, offset = 0x4, fixed_abs, tag = 'smem constant byte address 0x4 - core index']
  #allocation1 [shape = 'u32[144,128]{1,0:T(1,128)}', space=vmem, size = 0x12000, scoped, tag = 'internal scratch']
  #allocation2 [shape = 'f32[128,128]{1,0:T(8,128)}', space=vmem, size = 0x10000, scoped, tag = 'scratch operand']
  #allocation3 [shape = 'f32[1]{0:T(128)S(6)}', space=smem, size = 0x200, scoped, tag = 'scoped memory for tpu_custom_call.1']
  %s0 = inlined_call_operand.<no memory space> [shape: f32[1], index: 0, kind: input, shape index: {}]
  %s1 = inlined_call_operand.hbm [shape: bf16[256,256], index: 1, kind: input, shape index: {}]
  %s2 = inlined_call_operand.hbm [shape: bf16[256,128], index: 2, kind: input, shape index: {}]
  %s3 = inlined_call_operand.hbm [shape: bf16[256,128], index: 3, kind: input, shape index: {}]
  %s4 = inlined_call_operand.hbm [shape: bf16[128,128], index: 4, kind: input, shape index: {}]
  %s5 = inlined_call_operand.vmem [shape: f32[1,128], index: 5, kind: input, shape index: {}]
  %s6 = inlined_call_operand.hbm [shape: bf16[128,128], index: 6, kind: input, shape index: {}]
  %s7 = inlined_call_operand.vmem [shape: f32[1,128], index: 7, kind: input, shape index: {}]
  %s8 = inlined_call_operand.hbm [shape: f32[256,128], index: 8, kind: output, shape index: {}]
  %s9 = sld [smem:[#allocation0]]
  $region93: #{tpu_custom_call.1} parent=0
    _
  %s11 = ssub.s32 1, %s9
  %s12 = scalar_select 0, %s11, %s9
  %13 = sst [smem:[#allocation3]] %s0
  $region1: #{tpu_custom_call.1} parent=0
    #allocation4 [shape = 'u8[65536]{0}', space=vmem, size = 0x10000, scoped, tag = 'input window, operand 1']
    #allocation5 [shape = 's32[2]{0}', space=sflag, size = 0x8, scoped, tag = 'scoped memory for tpu_custom_call.1']
    #allocation6 [shape = 's32[2]{0}', space=sflag, size = 0x8, scoped, tag = 'scoped memory for tpu_custom_call.1']
    #allocation7 [shape = 'u8[65536]{0}', space=vmem, size = 0x10000, scoped, tag = 'input window, operand 2']
    #allocation8 [shape = 's32[2]{0}', space=sflag, size = 0x8, scoped, tag = 'scoped memory for tpu_custom_call.1']
    #allocation9 [shape = 'u8[65536]{0}', space=vmem, size = 0x10000, scoped, tag = 'input window, operand 3']
    #allocation10 [shape = 'u8[32768]{0}', space=vmem, size = 0x8000, scoped, tag = 'input window, operand 4, single buffered']
    #allocation11 [shape = 's32[1]{0}', space=sflag, size = 0x4, scoped, tag = 'scoped memory for tpu_custom_call.1']
    #allocation12 [shape = 'u8[32768]{0}', space=vmem, size = 0x8000, scoped, tag = 'input window, operand 6, single buffered']
    #allocation13 [shape = 'u8[131072]{0}', space=vmem, size = 0x20000, scoped, tag = 'output window, operand 0']
    %14 = vsyncpa [#allocation5], 0
    %s15 = scalar_lea.sflag [#allocation5], 1
    %16 = vsyncpa %s15, 0
    %17 = vsyncpa [#allocation8], 0
    %s18 = scalar_lea.sflag [#allocation8], 1
    %19 = vsyncpa %s18, 0
    %20 = vsyncpa [#allocation11], 0
    %21 = vsyncpa [#allocation6], 0
    %s22 = scalar_lea.sflag [#allocation6], 1
    %23 = vsyncpa %s22, 0
    loop: start=0, step=1, limit=6
    $region2: #{tpu_custom_call.1} parent=1 // loop_pre_header
      _
    $region3: #{tpu_custom_call.1} parent=1 // loop_header
      %s25 = sphi 0, %s29
      %p26 = scmp.ge.s32.totalorder %s25, 6
      %s32 = sphi 0, %s44
      %s33 = sphi 0, %s40
      %s34 = sphi 0, %s32
      %s35 = sphi 0, %s33
      %s36 = sphi 0, %s34
      %s37 = sphi 0, %s35
      %s45 = sphi 0, %s45
      %s47 = sphi 0, %s45
      %s48 = sphi 0, %s47
      %s62 = sphi 0, %s48
      %s70 = sphi 0, %s72
      %s73 = sphi 0, %s70
      %s74 = sphi 0, %s73
      %s90 = sphi 0, %s74
      %s96 = sphi 0, %s98
      %s99 = sphi 0, %s96
      %s100 = sphi 0, %s99
      %s116 = sphi 0, %s100
      %s122 = sphi 0, %s124
      %s125 = sphi 0, %s122
      %s126 = sphi 0, %s125
      %s142 = sphi 0, %s126
      %s146 = sphi 0, %s146
      %s148 = sphi 0, %s146
      %s149 = sphi 0, %s148
      %s163 = sphi 0, %s149
      %s167 = sphi 0, %s167
      %s169 = sphi 0, %s167
      %s170 = sphi 0, %s169
      %s184 = sphi 0, %s170
      %s188 = sphi 0, %s188
      %s190 = sphi 0, %s188
      %s191 = sphi 0, %s190
      %s205 = sphi 0, %s191
      %s209 = sphi 0, %s209
      %s211 = sphi 0, %s209
      %s212 = sphi 0, %s211
      %s226 = sphi 0, %s212
      %s232 = sphi 0, %s234
      %s235 = sphi 0, %s232
      %s236 = sphi 0, %s235
      %s252 = sphi 0, %s236
    $region4: #{tpu_custom_call.1} parent=1 // loop_header_branch
      %28 = sbr.rel (%p26) target = $region8
    $region5: #{tpu_custom_call.1} parent=1 // loop_body
      %s30 = ssub.s32 %s25, 1
      %s31 = ssub.s32 %s25, 2
      %s38 = sadd.s32 1, %s33
      %p39 = scmp.ge.s32.totalorder %s38, 2
      %s40 = scalar_select %p39, 0, %s38
      %s41 = sadd.s32 1, %s32
      %s42 = scalar_select %p39, %s41, %s32
      %p43 = scmp.ge.s32.totalorder %s42, 2
      %s44 = scalar_select %p43, 0, %s42
      %s46 = sadd.s32 %s45, 1
      %p49 = scmp.eq.s32.totalorder %s25, 3
      %p50 = scmp.ne.s32.totalorder %s45, %s47
      %p51 = scmp.eq.s32.totalorder %s25, 0
      %p52 = por %p50, %p51
      %p53 = scmp.ne.s32.totalorder %s45, %s47
      %p54 = scmp.eq.s32.totalorder %s30, 3
      %p55 = por %p53, %p54
      %p56 = scmp.ne.s32.totalorder %s47, %s48
      %p57 = scmp.eq.s32.totalorder %s30, 0
      %p58 = por %p56, %p57
      %p59 = scmp.ne.s32.totalorder %s47, %s48
      %p60 = scmp.eq.s32.totalorder %s31, 3
      %p61 = por %p59, %p60
      %p63 = scmp.ne.s32.totalorder %s48, %s62
      %p64 = scmp.eq.s32.totalorder %s31, 0
      %p65 = por %p63, %p64
      %s66 = ssub.s32 %s32, %s44
      %s67 = ssub.s32 %s33, %s40
      %s68 = sor.u32 %s66, %s67
      %p69 = scmp.eq.s32.totalorder %s68, 0
      %s71 = sadd.s32 %s70, 1
      %s72 = scalar_select %p69, %s70, %s71
      %p75 = pneg %p69
      %p76 = scmp.eq.s32.totalorder %s25, 3
      %p77 = por %p75, %p76
      %p78 = scmp.ne.s32.totalorder %s70, %s73
      %p79 = scmp.eq.s32.totalorder %s25, 0
      %p80 = por %p78, %p79
      %p81 = scmp.ne.s32.totalorder %s70, %s73
      %p82 = scmp.eq.s32.totalorder %s30, 3
      %p83 = por %p81, %p82
      %p84 = scmp.ne.s32.totalorder %s73, %s74
      %p85 = scmp.eq.s32.totalorder %s30, 0
      %p86 = por %p84, %p85
      %p87 = scmp.ne.s32.totalorder %s73, %s74
      %p88 = scmp.eq.s32.totalorder %s31, 3
      %p89 = por %p87, %p88
      %p91 = scmp.ne.s32.totalorder %s74, %s90
      %p92 = scmp.eq.s32.totalorder %s31, 0
      %p93 = por %p91, %p92
      %s94 = ssub.s32 %s33, %s40
      %p95 = scmp.eq.s32.totalorder %s94, 0
      %s97 = sadd.s32 %s96, 1
      %s98 = scalar_select %p95, %s96, %s97
      %p101 = pneg %p95
      %p102 = scmp.eq.s32.totalorder %s25, 3
      %p103 = por %p101, %p102
      %p104 = scmp.ne.s32.totalorder %s96, %s99
      %p105 = scmp.eq.s32.totalorder %s25, 0
      %p106 = por %p104, %p105
      %p107 = scmp.ne.s32.totalorder %s96, %s99
      %p108 = scmp.eq.s32.totalorder %s30, 3
      %p109 = por %p107, %p108
      %p110 = scmp.ne.s32.totalorder %s99, %s100
      %p111 = scmp.eq.s32.totalorder %s30, 0
      %p112 = por %p110, %p111
      %p113 = scmp.ne.s32.totalorder %s99, %s100
      %p114 = scmp.eq.s32.totalorder %s31, 3
      %p115 = por %p113, %p114
      %p117 = scmp.ne.s32.totalorder %s100, %s116
      %p118 = scmp.eq.s32.totalorder %s31, 0
      %p119 = por %p117, %p118
      %s120 = ssub.s32 %s32, %s44
      %p121 = scmp.eq.s32.totalorder %s120, 0
      %s123 = sadd.s32 %s122, 1
      %s124 = scalar_select %p121, %s122, %s123
      %p127 = pneg %p121
      %p128 = scmp.eq.s32.totalorder %s25, 3
      %p129 = por %p127, %p128
      %p130 = scmp.ne.s32.totalorder %s122, %s125
      %p131 = scmp.eq.s32.totalorder %s25, 0
      %p132 = por %p130, %p131
      %p133 = scmp.ne.s32.totalorder %s122, %s125
      %p134 = scmp.eq.s32.totalorder %s30, 3
      %p135 = por %p133, %p134
      %p136 = scmp.ne.s32.totalorder %s125, %s126
      %p137 = scmp.eq.s32.totalorder %s30, 0
      %p138 = por %p136, %p137
      %p139 = scmp.ne.s32.totalorder %s125, %s126
      %p140 = scmp.eq.s32.totalorder %s31, 3
      %p141 = por %p139, %p140
      %p143 = scmp.ne.s32.totalorder %s126, %s142
      %p144 = scmp.eq.s32.totalorder %s31, 0
      %p145 = por %p143, %p144
      %s147 = sadd.s32 %s146, 1
      %p150 = scmp.eq.s32.totalorder %s25, 3
      %p151 = scmp.ne.s32.totalorder %s146, %s148
      %p152 = scmp.eq.s32.totalorder %s25, 0
      %p153 = por %p151, %p152
      %p154 = scmp.ne.s32.totalorder %s146, %s148
      %p155 = scmp.eq.s32.totalorder %s30, 3
      %p156 = por %p154, %p155
      %p157 = scmp.ne.s32.totalorder %s148, %s149
      %p158 = scmp.eq.s32.totalorder %s30, 0
      %p159 = por %p157, %p158
      %p160 = scmp.ne.s32.totalorder %s148, %s149
      %p161 = scmp.eq.s32.totalorder %s31, 3
      %p162 = por %p160, %p161
      %p164 = scmp.ne.s32.totalorder %s149, %s163
      %p165 = scmp.eq.s32.totalorder %s31, 0
      %p166 = por %p164, %p165
      %s168 = sadd.s32 %s167, 1
      %p171 = scmp.eq.s32.totalorder %s25, 3
      %p172 = scmp.ne.s32.totalorder %s167, %s169
      %p173 = scmp.eq.s32.totalorder %s25, 0
      %p174 = por %p172, %p173
      %p175 = scmp.ne.s32.totalorder %s167, %s169
      %p176 = scmp.eq.s32.totalorder %s30, 3
      %p177 = por %p175, %p176
      %p178 = scmp.ne.s32.totalorder %s169, %s170
      %p179 = scmp.eq.s32.totalorder %s30, 0
      %p180 = por %p178, %p179
      %p181 = scmp.ne.s32.totalorder %s169, %s170
      %p182 = scmp.eq.s32.totalorder %s31, 3
      %p183 = por %p181, %p182
      %p185 = scmp.ne.s32.totalorder %s170, %s184
      %p186 = scmp.eq.s32.totalorder %s31, 0
      %p187 = por %p185, %p186
      %s189 = sadd.s32 %s188, 1
      %p192 = scmp.eq.s32.totalorder %s25, 3
      %p193 = scmp.ne.s32.totalorder %s188, %s190
      %p194 = scmp.eq.s32.totalorder %s25, 0
      %p195 = por %p193, %p194
      %p196 = scmp.ne.s32.totalorder %s188, %s190
      %p197 = scmp.eq.s32.totalorder %s30, 3
      %p198 = por %p196, %p197
      %p199 = scmp.ne.s32.totalorder %s190, %s191
      %p200 = scmp.eq.s32.totalorder %s30, 0
      %p201 = por %p199, %p200
      %p202 = scmp.ne.s32.totalorder %s190, %s191
      %p203 = scmp.eq.s32.totalorder %s31, 3
      %p204 = por %p202, %p203
      %p206 = scmp.ne.s32.totalorder %s191, %s205
      %p207 = scmp.eq.s32.totalorder %s31, 0
      %p208 = por %p206, %p207
      %s210 = sadd.s32 %s209, 1
      %p213 = scmp.eq.s32.totalorder %s25, 3
      %p214 = scmp.ne.s32.totalorder %s209, %s211
      %p215 = scmp.eq.s32.totalorder %s25, 0
      %p216 = por %p214, %p215
      %p217 = scmp.ne.s32.totalorder %s209, %s211
      %p218 = scmp.eq.s32.totalorder %s30, 3
      %p219 = por %p217, %p218
      %p220 = scmp.ne.s32.totalorder %s211, %s212
      %p221 = scmp.eq.s32.totalorder %s30, 0
      %p222 = por %p220, %p221
      %p223 = scmp.ne.s32.totalorder %s211, %s212
      %p224 = scmp.eq.s32.totalorder %s31, 3
      %p225 = por %p223, %p224
      %p227 = scmp.ne.s32.totalorder %s212, %s226
      %p228 = scmp.eq.s32.totalorder %s31, 0
      %p229 = por %p227, %p228
      %s230 = ssub.s32 %s32, %s44
      %p231 = scmp.eq.s32.totalorder %s230, 0
      %s233 = sadd.s32 %s232, 1
      %s234 = scalar_select %p231, %s232, %s233
      %p237 = pneg %p231
      %p238 = scmp.eq.s32.totalorder %s25, 3
      %p239 = por %p237, %p238
      %p240 = scmp.ne.s32.totalorder %s232, %s235
      %p241 = scmp.eq.s32.totalorder %s25, 0
      %p242 = por %p240, %p241
      %p243 = scmp.ne.s32.totalorder %s232, %s235
      %p244 = scmp.eq.s32.totalorder %s30, 3
      %p245 = por %p243, %p244
      %p246 = scmp.ne.s32.totalorder %s235, %s236
      %p247 = scmp.eq.s32.totalorder %s30, 0
      %p248 = por %p246, %p247
      %p249 = scmp.ne.s32.totalorder %s235, %s236
      %p250 = scmp.eq.s32.totalorder %s31, 3
      %p251 = por %p249, %p250
      %p253 = scmp.ne.s32.totalorder %s236, %s252
      %p254 = scmp.eq.s32.totalorder %s31, 0
      %p255 = por %p253, %p254
      %p256 = scmp.le.s32.totalorder 1, %s25
      %p257 = scmp.lt.s32.totalorder %s25, 5
      %p258 = pnand %p256, %p257
      %p259 = pneg %p258
      // Predicated region
      $region9: #{tpu_custom_call.1} parent=5 // pred_check
        _
      $region10: #{tpu_custom_call.1} parent=5 // pred_check_branch
        %261 = sbr.rel (%p258) target = $region12
      $region11: #{tpu_custom_call.1} parent=5 // pred_region
        %s262 = ssub.s32 %s25, 1
        // Predicated region
        $region13: #{tpu_custom_call.1} parent=11 // pred_check
          %p263 = pneg %p58
        $region14: #{tpu_custom_call.1} parent=11 // pred_check_branch
          %265 = sbr.rel (%p263) target = $region16
        $region15: #{tpu_custom_call.1} parent=11 // pred_region
          _
        $region16: #{tpu_custom_call.1} parent=11 // pred_fallthru
          _
        // Predicated region
        $region17: #{tpu_custom_call.1} parent=11 // pred_check
          %p266 = pneg %p159
        $region18: #{tpu_custom_call.1} parent=11 // pred_check_branch
          %268 = sbr.rel (%p266) target = $region20
        $region19: #{tpu_custom_call.1} parent=11 // pred_region
          %s270 = ssub.s32 1024, 1024
          %271 = vsyncadd [#allocation11], %s270
          %s272 = sshll.u32 [#allocation10], 4
          %s273 = int_to_ptr.vmem [resolvable:$true] %s272
          %278 = dma.hbm_to_vmem [thread:$0]  %s4, 1024, %s273, [#allocation11], 64, 64, 4
        $region20: #{tpu_custom_call.1} parent=11 // pred_fallthru
          _
        // Predicated region
        $region21: #{tpu_custom_call.1} parent=11 // pred_check
          %p279 = pneg %p180
        $region22: #{tpu_custom_call.1} parent=11 // pred_check_branch
          %281 = sbr.rel (%p279) target = $region24
        $region23: #{tpu_custom_call.1} parent=11 // pred_region
          _
        $region24: #{tpu_custom_call.1} parent=11 // pred_fallthru
          _
        // Predicated region
        $region25: #{tpu_custom_call.1} parent=11 // pred_check
          %p282 = pneg %p201
        $region26: #{tpu_custom_call.1} parent=11 // pred_check_branch
          %284 = sbr.rel (%p282) target = $region28
        $region27: #{tpu_custom_call.1} parent=11 // pred_region
          %s286 = ssub.s32 1024, 1024
          %287 = vsyncadd [#allocation11], %s286
          %s288 = sshll.u32 [#allocation12], 4
          %s289 = int_to_ptr.vmem [resolvable:$true] %s288
          %294 = dma.hbm_to_vmem [thread:$0]  %s6, 1024, %s289, [#allocation11], 64, 64, 4
        $region28: #{tpu_custom_call.1} parent=11 // pred_fallthru
          _
        // Predicated region
        $region29: #{tpu_custom_call.1} parent=11 // pred_check
          %p295 = pneg %p222
        $region30: #{tpu_custom_call.1} parent=11 // pred_check_branch
          %297 = sbr.rel (%p295) target = $region32
        $region31: #{tpu_custom_call.1} parent=11 // pred_region
          _
        $region32: #{tpu_custom_call.1} parent=11 // pred_fallthru
          _
      $region12: #{tpu_custom_call.1} parent=5 // pred_fallthru
        _
      %p298 = scmp.lt.s32.totalorder %s25, 4
      // Predicated region
      $region33: #{tpu_custom_call.1} parent=5 // pred_check
        %p299 = pneg %p298
      $region34: #{tpu_custom_call.1} parent=5 // pred_check_branch
        %301 = sbr.rel (%p299) target = $region36
      $region35: #{tpu_custom_call.1} parent=5 // pred_region
        // Predicated region
        $region37: #{tpu_custom_call.1} parent=35 // pred_check
          %p302 = pneg %p80
        $region38: #{tpu_custom_call.1} parent=35 // pred_check_branch
          %304 = sbr.rel (%p302) target = $region40
        $region39: #{tpu_custom_call.1} parent=35 // pred_region
          %s305 = sand.u32 %s70, 1
          %s306 = scalar_lea.sflag [#allocation5], %s305
          %s307 = sand.u32 %s70, 1
          %s308 = smul.addr %s307, 64
          %s309 = scalar_lea.vmem [#allocation4], %s308
          %s310 = smul.u32 16, %s32
          %s312 = ssub.s32 1024, 1024
          %313 = vsyncadd %s306, %s312
          %s314 = smul.addr %s310, 2
          %s315 = sadd.s32 %s33, %s314
          %s316 = smul.addr %s315, 64
          %s317 = scalar_lea.hbm %s1, %s316
          %s318 = sshll.u32 %s309, 4
          %s319 = int_to_ptr.vmem [resolvable:$true] %s318
          %324 = dma.hbm_to_vmem [thread:$0]  %s317, 1024, %s319, %s306, 128, 64, 4
        $region40: #{tpu_custom_call.1} parent=35 // pred_fallthru
          _
        // Predicated region
        $region41: #{tpu_custom_call.1} parent=35 // pred_check
          %p325 = pneg %p106
        $region42: #{tpu_custom_call.1} parent=35 // pred_check_branch
          %327 = sbr.rel (%p325) target = $region44
        $region43: #{tpu_custom_call.1} parent=35 // pred_region
          %s328 = sand.u32 %s25, 1
          %s329 = scalar_lea.sflag [#allocation8], %s328
          %s330 = sand.u32 %s96, 1
          %s331 = smul.addr %s330, 64
          %s332 = scalar_lea.vmem [#allocation7], %s331
          %s333 = smul.u32 16, %s33
          %s335 = ssub.s32 1024, 1024
          %336 = vsyncadd %s329, %s335
          %s337 = smul.addr %s333, 64
          %s338 = scalar_lea.hbm %s2, %s337
          %s339 = sshll.u32 %s332, 4
          %s340 = int_to_ptr.vmem [resolvable:$true] %s339
          %345 = dma.hbm_to_vmem [thread:$0]  %s338, 1024, %s340, %s329, 64, 64, 4
        $region44: #{tpu_custom_call.1} parent=35 // pred_fallthru
          _
        // Predicated region
        $region45: #{tpu_custom_call.1} parent=35 // pred_check
          %p346 = pneg %p132
        $region46: #{tpu_custom_call.1} parent=35 // pred_check_branch
          %348 = sbr.rel (%p346) target = $region48
        $region47: #{tpu_custom_call.1} parent=35 // pred_region
          %s349 = sand.u32 %s25, 1
          %s350 = scalar_lea.sflag [#allocation8], %s349
          %s351 = sand.u32 %s122, 1
          %s352 = smul.addr %s351, 64
          %s353 = scalar_lea.vmem [#allocation9], %s352
          %s354 = smul.u32 16, %s32
          %s356 = ssub.s32 1024, 1024
          %357 = vsyncadd %s350, %s356
          %s358 = smul.addr %s354, 64
          %s359 = scalar_lea.hbm %s3, %s358
          %s360 = sshll.u32 %s353, 4
          %s361 = int_to_ptr.vmem [resolvable:$true] %s360
          %366 = dma.hbm_to_vmem [thread:$0]  %s359, 1024, %s361, %s350, 64, 64, 4
        $region48: #{tpu_custom_call.1} parent=35 // pred_fallthru
          _
      $region36: #{tpu_custom_call.1} parent=5 // pred_fallthru
        _
      %p367 = scmp.le.s32.totalorder 1, %s25
      %p368 = scmp.lt.s32.totalorder %s25, 5
      %p369 = pnand %p367, %p368
      %p370 = pneg %p369
      // Predicated region
      $region49: #{tpu_custom_call.1} parent=5 // pred_check
        _
      $region50: #{tpu_custom_call.1} parent=5 // pred_check_branch
        %372 = sbr.rel (%p369) target = $region52
      $region51: #{tpu_custom_call.1} parent=5 // pred_region
        %s373 = ssub.s32 %s25, 1
        %s374 = sand.u32 %s73, 1
        %s375 = scalar_lea.sflag [#allocation5], %s374
        %s376 = sand.u32 %s73, 1
        %s377 = smul.addr %s376, 64
        %s378 = scalar_lea.vmem [#allocation4], %s377
        // Predicated region
        $region53: #{tpu_custom_call.1} parent=51 // pred_check
          %p379 = pneg %p86
        $region54: #{tpu_custom_call.1} parent=51 // pred_check_branch
          %381 = sbr.rel (%p379) target = $region56
        $region55: #{tpu_custom_call.1} parent=51 // pred_region
          %382 = dma.done %s375, 1024
        $region56: #{tpu_custom_call.1} parent=51 // pred_fallthru
          _
        %s383 = sand.u32 %s30, 1
        %s384 = scalar_lea.sflag [#allocation8], %s383
        %s385 = sand.u32 %s99, 1
        %s386 = smul.addr %s385, 64
        %s387 = scalar_lea.vmem [#allocation7], %s386
        // Predicated region
        $region57: #{tpu_custom_call.1} parent=51 // pred_check
          %p388 = pneg %p112
        $region58: #{tpu_custom_call.1} parent=51 // pred_check_branch
          %390 = sbr.rel (%p388) target = $region60
        $region59: #{tpu_custom_call.1} parent=51 // pred_region
          %391 = dma.done %s384, 1024
        $region60: #{tpu_custom_call.1} parent=51 // pred_fallthru
          _
        %s392 = sand.u32 %s30, 1
        %s393 = scalar_lea.sflag [#allocation8], %s392
        %s394 = sand.u32 %s125, 1
        %s395 = smul.addr %s394, 64
        %s396 = scalar_lea.vmem [#allocation9], %s395
        // Predicated region
        $region61: #{tpu_custom_call.1} parent=51 // pred_check
          %p397 = pneg %p138
        $region62: #{tpu_custom_call.1} parent=51 // pred_check_branch
          %399 = sbr.rel (%p397) target = $region64
        $region63: #{tpu_custom_call.1} parent=51 // pred_region
          %400 = dma.done %s393, 1024
        $region64: #{tpu_custom_call.1} parent=51 // pred_fallthru
          _
        // Predicated region
        $region65: #{tpu_custom_call.1} parent=51 // pred_check
          %p401 = pneg %p159
        $region66: #{tpu_custom_call.1} parent=51 // pred_check_branch
          %403 = sbr.rel (%p401) target = $region68
        $region67: #{tpu_custom_call.1} parent=51 // pred_region
          %404 = dma.done [#allocation11], 1024
        $region68: #{tpu_custom_call.1} parent=51 // pred_fallthru
          _
        // Predicated region
        $region69: #{tpu_custom_call.1} parent=51 // pred_check
          %p405 = pneg %p201
        $region70: #{tpu_custom_call.1} parent=51 // pred_check_branch
          %407 = sbr.rel (%p405) target = $region72
        $region71: #{tpu_custom_call.1} parent=51 // pred_region
          %408 = dma.done [#allocation11], 1024
        $region72: #{tpu_custom_call.1} parent=51 // pred_fallthru
          _
        %p409 = pneg %p58
        %p410 = pneg %p55
        %s411 = sand.u32 %s73, 1
        %s412 = scalar_lea.sflag [#allocation5], %s411
        %s413 = sand.u32 %s73, 1
        %s414 = smul.addr %s413, 64
        %s415 = scalar_lea.vmem [#allocation4], %s414
        %p416 = pneg %p86
        %p417 = pneg %p83
        %s418 = sand.u32 %s30, 1
        %s419 = scalar_lea.sflag [#allocation8], %s418
        %s420 = sand.u32 %s99, 1
        %s421 = smul.addr %s420, 64
        %s422 = scalar_lea.vmem [#allocation7], %s421
        %p423 = pneg %p112
        %p424 = pneg %p109
        %s425 = sand.u32 %s30, 1
        %s426 = scalar_lea.sflag [#allocation8], %s425
        %s427 = sand.u32 %s125, 1
        %s428 = smul.addr %s427, 64
        %s429 = scalar_lea.vmem [#allocation9], %s428
        %p430 = pneg %p138
        %p431 = pneg %p135
        %p432 = pneg %p159
        %p433 = pneg %p156
        %p434 = pneg %p180
        %p435 = pneg %p177
        %p436 = pneg %p201
        %p437 = pneg %p198
        %p438 = pneg %p222
        %p439 = pneg %p219
        %p440 = pneg %p248
        %p441 = pneg %p245
        %s442 = sand.u32 %s235, 1
        %s443 = scalar_lea.sflag [#allocation6], %s442
        %s444 = sand.u32 %s235, 1
        %s445 = smul.addr %s444, 128
        %s446 = scalar_lea.vmem [#allocation13], %s445
        %s447 = smul.u32 16, %s34
        %s448 = smul.u32 16, %s35
        %s449 = smul.u32 16, %s34
        %s450 = smul.u32 16, %s34
        %p452 = scmp.eq.s32.totalorder %s35, 0
        // Predicated region
        $region73: #{tpu_custom_call.1} parent=51 // pred_check
          %p453 = pneg %p452
        $region74: #{tpu_custom_call.1} parent=51 // pred_check_branch
          %455 = sbr.rel (%p453) target = $region76
        $region75: #{tpu_custom_call.1} parent=51 // pred_region
          %456 = vst [vmem:[#allocation2] sm:$0xff] 0.0
          %457 = vst [vmem:[#allocation2 + $0x8] sm:$0xff] 0.0
          %458 = vst [vmem:[#allocation2 + $0x10] sm:$0xff] 0.0
          %459 = vst [vmem:[#allocation2 + $0x18] sm:$0xff] 0.0
          %460 = vst [vmem:[#allocation2 + $0x20] sm:$0xff] 0.0
          %461 = vst [vmem:[#allocation2 + $0x28] sm:$0xff] 0.0
          %462 = vst [vmem:[#allocation2 + $0x30] sm:$0xff] 0.0
          %463 = vst [vmem:[#allocation2 + $0x38] sm:$0xff] 0.0
          %464 = vst [vmem:[#allocation2 + $0x40] sm:$0xff] 0.0
          %465 = vst [vmem:[#allocation2 + $0x48] sm:$0xff] 0.0
          %466 = vst [vmem:[#allocation2 + $0x50] sm:$0xff] 0.0
          %467 = vst [vmem:[#allocation2 + $0x58] sm:$0xff] 0.0
          %468 = vst [vmem:[#allocation2 + $0x60] sm:$0xff] 0.0
          %469 = vst [vmem:[#allocation2 + $0x68] sm:$0xff] 0.0
          %470 = vst [vmem:[#allocation2 + $0x70] sm:$0xff] 0.0
          %471 = vst [vmem:[#allocation2 + $0x78] sm:$0xff] 0.0
        $region76: #{tpu_custom_call.1} parent=51 // pred_fallthru
          _
        %v472 = vld [vmem:[#allocation2] sm:$0xff]
        %v473 = vld [vmem:[#allocation2 + $0x8] sm:$0xff]
        %v474 = vld [vmem:[#allocation2 + $0x10] sm:$0xff]
        %v475 = vld [vmem:[#allocation2 + $0x18] sm:$0xff]
        %v476 = vld [vmem:[#allocation2 + $0x20] sm:$0xff]
        %v477 = vld [vmem:[#allocation2 + $0x28] sm:$0xff]
        %v478 = vld [vmem:[#allocation2 + $0x30] sm:$0xff]
        %v479 = vld [vmem:[#allocation2 + $0x38] sm:$0xff]
        %v480 = vld [vmem:[#allocation2 + $0x40] sm:$0xff]
        %v481 = vld [vmem:[#allocation2 + $0x48] sm:$0xff]
        %v482 = vld [vmem:[#allocation2 + $0x50] sm:$0xff]
        %v483 = vld [vmem:[#allocation2 + $0x58] sm:$0xff]
        %v484 = vld [vmem:[#allocation2 + $0x60] sm:$0xff]
        %v485 = vld [vmem:[#allocation2 + $0x68] sm:$0xff]
        %v486 = vld [vmem:[#allocation2 + $0x70] sm:$0xff]
        %v487 = vld [vmem:[#allocation2 + $0x78] sm:$0xff]
        %v488 = vld [vmem:[%s378] sm:$0xf]
        %v489 = vld [vmem:[%s378 + $0x4] sm:$0xf]
        %v490 = vld [vmem:[%s378 + $0x8] sm:$0xf]
        %v491 = vld [vmem:[%s378 + $0xc] sm:$0xf]
        %v492 = vld [vmem:[%s378 + $0x10] sm:$0xf]
        %v493 = vld [vmem:[%s378 + $0x14] sm:$0xf]
        %v494 = vld [vmem:[%s378 + $0x18] sm:$0xf]
        %v495 = vld [vmem:[%s378 + $0x1c] sm:$0xf]
        %v496 = vld [vmem:[%s378 + $0x20] sm:$0xf]
        %v497 = vld [vmem:[%s378 + $0x24] sm:$0xf]
        %v498 = vld [vmem:[%s378 + $0x28] sm:$0xf]
        %v499 = vld [vmem:[%s378 + $0x2c] sm:$0xf]
        %v500 = vld [vmem:[%s378 + $0x30] sm:$0xf]
        %v501 = vld [vmem:[%s378 + $0x34] sm:$0xf]
        %v502 = vld [vmem:[%s378 + $0x38] sm:$0xf]
        %v503 = vld [vmem:[%s378 + $0x3c] sm:$0xf]
        %v504 = vld [vmem:[%s387] sm:$0xf]
        %v505 = vld [vmem:[%s387 + $0x4] sm:$0xf]
        %v506 = vld [vmem:[%s387 + $0x8] sm:$0xf]
        %v507 = vld [vmem:[%s387 + $0xc] sm:$0xf]
        %v508 = vld [vmem:[%s387 + $0x10] sm:$0xf]
        %v509 = vld [vmem:[%s387 + $0x14] sm:$0xf]
        %v510 = vld [vmem:[%s387 + $0x18] sm:$0xf]
        %v511 = vld [vmem:[%s387 + $0x1c] sm:$0xf]
        %v512 = vld [vmem:[%s387 + $0x20] sm:$0xf]
        %v513 = vld [vmem:[%s387 + $0x24] sm:$0xf]
        %v514 = vld [vmem:[%s387 + $0x28] sm:$0xf]
        %v515 = vld [vmem:[%s387 + $0x2c] sm:$0xf]
        %v516 = vld [vmem:[%s387 + $0x30] sm:$0xf]
        %v517 = vld [vmem:[%s387 + $0x34] sm:$0xf]
        %v518 = vld [vmem:[%s387 + $0x38] sm:$0xf]
        %v519 = vld [vmem:[%s387 + $0x3c] sm:$0xf]
        %v536 = vunpack.c.l.b16 %v488
        %v537 = vunpack.c.l.b16 %v489
        %v538 = vunpack.c.l.b16 %v490
        %v539 = vunpack.c.l.b16 %v491
        %v540 = vunpack.c.l.b16 %v492
        %v541 = vunpack.c.l.b16 %v493
        %v542 = vunpack.c.l.b16 %v494
        %v543 = vunpack.c.l.b16 %v495
        %v544 = vunpack.c.l.b16 %v496
        %v545 = vunpack.c.l.b16 %v497
        %v546 = vunpack.c.l.b16 %v498
        %v547 = vunpack.c.l.b16 %v499
        %v548 = vunpack.c.l.b16 %v500
        %v549 = vunpack.c.l.b16 %v501
        %v550 = vunpack.c.l.b16 %v502
        %v551 = vunpack.c.l.b16 %v503
        %v552 = vpack.c.b16 %v537, %v536
        %v553 = vpack.c.b16 %v539, %v538
        %v554 = vpack.c.b16 %v541, %v540
        %v555 = vpack.c.b16 %v543, %v542
        %v556 = vpack.c.b16 %v545, %v544
        %v557 = vpack.c.b16 %v547, %v546
        %v558 = vpack.c.b16 %v549, %v548
        %v559 = vpack.c.b16 %v551, %v550
        %v584 = vunpack.c.l.b16 %v504
        %v585 = vunpack.c.l.b16 %v505
        %v586 = vunpack.c.l.b16 %v506
        %v587 = vunpack.c.l.b16 %v507
        %v588 = vunpack.c.l.b16 %v508
        %v589 = vunpack.c.l.b16 %v509
        %v590 = vunpack.c.l.b16 %v510
        %v591 = vunpack.c.l.b16 %v511
        %v592 = vunpack.c.l.b16 %v512
        %v593 = vunpack.c.l.b16 %v513
        %v594 = vunpack.c.l.b16 %v514
        %v595 = vunpack.c.l.b16 %v515
        %v596 = vunpack.c.l.b16 %v516
        %v597 = vunpack.c.l.b16 %v517
        %v598 = vunpack.c.l.b16 %v518
        %v599 = vunpack.c.l.b16 %v519
        %v600 = vpack.c.b16 %v585, %v584
        %v601 = vpack.c.b16 %v587, %v586
        %v602 = vpack.c.b16 %v589, %v588
        %v603 = vpack.c.b16 %v591, %v590
        %v604 = vpack.c.b16 %v593, %v592
        %v605 = vpack.c.b16 %v595, %v594
        %v606 = vpack.c.b16 %v597, %v596
        %v607 = vpack.c.b16 %v599, %v598
        %616 = vmatprep.subr.bf16.mxu0 0
        %617 = vmatpush1.bf16.msra.mxu0 %v600
        %618 = vmatprep.subr.bf16.mxu0 0
        %619 = vmatpush1.bf16.msra.mxu0 %v601
        %620 = vmatprep.subr.bf16.mxu0 0
        %621 = vmatpush1.bf16.msra.mxu0 %v602
        %622 = vmatprep.subr.bf16.mxu0 0
        %623 = vmatpush1.bf16.msra.mxu0 %v603
        %624 = vmatprep.subr.bf16.mxu0 0
        %625 = vmatpush1.bf16.msra.mxu0 %v604
        %626 = vmatprep.subr.bf16.mxu0 0
        %627 = vmatpush1.bf16.msra.mxu0 %v605
        %628 = vmatprep.subr.bf16.mxu0 0
        %629 = vmatpush1.bf16.msra.mxu0 %v606
        %630 = vmatprep.subr.bf16.mxu0 0
        %631 = vmatpush1.bf16.msra.mxu0 %v607
        %632 = vmatprep.subr.bf16.mxu0 0
        %633 = vmatpush1.bf16.msra.mxu0 0
        %634 = vmatprep.subr.bf16.mxu0 0
        %635 = vmatpush1.bf16.msra.mxu0 0
        %636 = vmatprep.subr.bf16.mxu0 0
        %637 = vmatpush1.bf16.msra.mxu0 0
        %638 = vmatprep.subr.bf16.mxu0 0
        %639 = vmatpush1.bf16.msra.mxu0 0
        %640 = vmatprep.subr.bf16.mxu0 0
        %641 = vmatpush1.bf16.msra.mxu0 0
        %642 = vmatprep.subr.bf16.mxu0 0
        %643 = vmatpush1.bf16.msra.mxu0 0
        %644 = vmatprep.subr.bf16.mxu0 0
        %645 = vmatpush1.bf16.msra.mxu0 0
        %646 = vmatprep.subr.bf16.mxu0 0
        %647 = vmatpush1.bf16.msra.mxu0 0
        %648 = vmatprep.mubr.bf16.mxu0 0
        %649 = vmatmul.mubr.bf16.gmra.mrb[0].mxu0 %v552
        %v650 = vpop.f32.mrb[0].mxu0
        %v651 = vadd.f32 0.0, %v650
        %v652 = vpop.f32.mrb[0].mxu0
        %v653 = vpop.f32.mrb[0].mxu0
        %v654 = vadd.f32 0.0, %v653
        %v655 = vpop.f32.mrb[0].mxu0
        %656 = vmatprep.mubr.bf16.mxu0 0
        %657 = vmatmul.mubr.bf16.gmra.mrb[0].mxu0 %v553
        %v658 = vpop.f32.mrb[0].mxu0
        %v659 = vadd.f32 0.0, %v658
        %v660 = vpop.f32.mrb[0].mxu0
        %v661 = vpop.f32.mrb[0].mxu0
        %v662 = vadd.f32 0.0, %v661
        %v663 = vpop.f32.mrb[0].mxu0
        %664 = vmatprep.mubr.bf16.mxu0 0
        %665 = vmatmul.mubr.bf16.gmra.mrb[0].mxu0 %v554
        %v666 = vpop.f32.mrb[0].mxu0
        %v667 = vadd.f32 0.0, %v666
        %v668 = vpop.f32.mrb[0].mxu0
        %v669 = vpop.f32.mrb[0].mxu0
        %v670 = vadd.f32 0.0, %v669
        %v671 = vpop.f32.mrb[0].mxu0
        %672 = vmatprep.mubr.bf16.mxu0 0
        %673 = vmatmul.mubr.bf16.gmra.mrb[0].mxu0 %v555
        %v674 = vpop.f32.mrb[0].mxu0
        %v675 = vadd.f32 0.0, %v674
        %v676 = vpop.f32.mrb[0].mxu0
        %v677 = vpop.f32.mrb[0].mxu0
        %v678 = vadd.f32 0.0, %v677
        %v679 = vpop.f32.mrb[0].mxu0
        %680 = vmatprep.mubr.bf16.mxu0 0
        %681 = vmatmul.mubr.bf16.gmra.mrb[0].mxu0 %v556
        %v682 = vpop.f32.mrb[0].mxu0
        %v683 = vadd.f32 0.0, %v682
        %v684 = vpop.f32.mrb[0].mxu0
        %v685 = vpop.f32.mrb[0].mxu0
        %v686 = vadd.f32 0.0, %v685
        %v687 = vpop.f32.mrb[0].mxu0
        %688 = vmatprep.mubr.bf16.mxu0 0
        %689 = vmatmul.mubr.bf16.gmra.mrb[0].mxu0 %v557
        %v690 = vpop.f32.mrb[0].mxu0
        %v691 = vadd.f32 0.0, %v690
        %v692 = vpop.f32.mrb[0].mxu0
        %v693 = vpop.f32.mrb[0].mxu0
        %v694 = vadd.f32 0.0, %v693
        %v695 = vpop.f32.mrb[0].mxu0
        %696 = vmatprep.mubr.bf16.mxu0 0
        %697 = vmatmul.mubr.bf16.gmra.mrb[0].mxu0 %v558
        %v698 = vpop.f32.mrb[0].mxu0
        %v699 = vadd.f32 0.0, %v698
        %v700 = vpop.f32.mrb[0].mxu0
        %v701 = vpop.f32.mrb[0].mxu0
        %v702 = vadd.f32 0.0, %v701
        %v703 = vpop.f32.mrb[0].mxu0
        %704 = vmatprep.mubr.bf16.mxu0 0
        %705 = vmatmul.mubr.bf16.gmra.mrb[0].mxu0 %v559
        %v706 = vpop.f32.mrb[0].mxu0
        %v707 = vadd.f32 0.0, %v706
        %v708 = vpop.f32.mrb[0].mxu0
        %v709 = vpop.f32.mrb[0].mxu0
        %v710 = vadd.f32 0.0, %v709
        %v711 = vpop.f32.mrb[0].mxu0
        %712 = vdwg.mxu0
        %v713 = vadd.f32 %v472, %v651
        %v714 = vadd.f32 %v473, %v654
        %v715 = vadd.f32 %v474, %v659
        %v716 = vadd.f32 %v475, %v662
        %v717 = vadd.f32 %v476, %v667
        %v718 = vadd.f32 %v477, %v670
        %v719 = vadd.f32 %v478, %v675
        %v720 = vadd.f32 %v479, %v678
        %v721 = vadd.f32 %v480, %v683
        %v722 = vadd.f32 %v481, %v686
        %v723 = vadd.f32 %v482, %v691
        %v724 = vadd.f32 %v483, %v694
        %v725 = vadd.f32 %v484, %v699
        %v726 = vadd.f32 %v485, %v702
        %v727 = vadd.f32 %v486, %v707
        %v728 = vadd.f32 %v487, %v710
        %729 = vst [vmem:[#allocation2] sm:$0xff] %v713
        %730 = vst [vmem:[#allocation2 + $0x8] sm:$0xff] %v714
        %731 = vst [vmem:[#allocation2 + $0x10] sm:$0xff] %v715
        %732 = vst [vmem:[#allocation2 + $0x18] sm:$0xff] %v716
        %733 = vst [vmem:[#allocation2 + $0x20] sm:$0xff] %v717
        %734 = vst [vmem:[#allocation2 + $0x28] sm:$0xff] %v718
        %735 = vst [vmem:[#allocation2 + $0x30] sm:$0xff] %v719
        %736 = vst [vmem:[#allocation2 + $0x38] sm:$0xff] %v720
        %737 = vst [vmem:[#allocation2 + $0x40] sm:$0xff] %v721
        %738 = vst [vmem:[#allocation2 + $0x48] sm:$0xff] %v722
        %739 = vst [vmem:[#allocation2 + $0x50] sm:$0xff] %v723
        %740 = vst [vmem:[#allocation2 + $0x58] sm:$0xff] %v724
        %741 = vst [vmem:[#allocation2 + $0x60] sm:$0xff] %v725
        %742 = vst [vmem:[#allocation2 + $0x68] sm:$0xff] %v726
        %743 = vst [vmem:[#allocation2 + $0x70] sm:$0xff] %v727
        %744 = vst [vmem:[#allocation2 + $0x78] sm:$0xff] %v728
        %p745 = scmp.eq.s32.totalorder %s35, 1
        // Predicated region
        $region77: #{tpu_custom_call.1} parent=51 // pred_check
          %p746 = pneg %p745
        $region78: #{tpu_custom_call.1} parent=51 // pred_check_branch
          %748 = sbr.rel (%p746) target = $region80
        $region79: #{tpu_custom_call.1} parent=51 // pred_region
          %v749 = vld [vmem:[#allocation2] sm:$0xff]
          %v750 = vld [vmem:[#allocation2 + $0x8] sm:$0xff]
          %v751 = vld [vmem:[#allocation2 + $0x10] sm:$0xff]
          %v752 = vld [vmem:[#allocation2 + $0x18] sm:$0xff]
          %v753 = vld [vmem:[#allocation2 + $0x20] sm:$0xff]
          %v754 = vld [vmem:[#allocation2 + $0x28] sm:$0xff]
          %v755 = vld [vmem:[#allocation2 + $0x30] sm:$0xff]
          %v756 = vld [vmem:[#allocation2 + $0x38] sm:$0xff]
          %v757 = vld [vmem:[#allocation2 + $0x40] sm:$0xff]
          %v758 = vld [vmem:[#allocation2 + $0x48] sm:$0xff]
          %v759 = vld [vmem:[#allocation2 + $0x50] sm:$0xff]
          %v760 = vld [vmem:[#allocation2 + $0x58] sm:$0xff]
          %v761 = vld [vmem:[#allocation2 + $0x60] sm:$0xff]
          %v762 = vld [vmem:[#allocation2 + $0x68] sm:$0xff]
          %v763 = vld [vmem:[#allocation2 + $0x70] sm:$0xff]
          %v764 = vld [vmem:[#allocation2 + $0x78] sm:$0xff]
          %v765 = vmax.f32 %v749, 1.0
          %v766 = vmax.f32 %v750, 1.0
          %v767 = vmax.f32 %v751, 1.0
          %v768 = vmax.f32 %v752, 1.0
          %v769 = vmax.f32 %v753, 1.0
          %v770 = vmax.f32 %v754, 1.0
          %v771 = vmax.f32 %v755, 1.0
          %v772 = vmax.f32 %v756, 1.0
          %v773 = vmax.f32 %v757, 1.0
          %v774 = vmax.f32 %v758, 1.0
          %v775 = vmax.f32 %v759, 1.0
          %v776 = vmax.f32 %v760, 1.0
          %v777 = vmax.f32 %v761, 1.0
          %v778 = vmax.f32 %v762, 1.0
          %v779 = vmax.f32 %v763, 1.0
          %v780 = vmax.f32 %v764, 1.0
          %v781 = vrcp.pop %v765
          %v782 = vrcp.pop %v766
          %v783 = vrcp.pop %v767
          %v784 = vrcp.pop %v768
          %v785 = vrcp.pop %v769
          %v786 = vrcp.pop %v770
          %v787 = vrcp.pop %v771
          %v788 = vrcp.pop %v772
          %v789 = vrcp.pop %v773
          %v790 = vrcp.pop %v774
          %v791 = vrcp.pop %v775
          %v792 = vrcp.pop %v776
          %v793 = vrcp.pop %v777
          %v794 = vrcp.pop %v778
          %v795 = vrcp.pop %v779
          %v796 = vrcp.pop %v780
          %798 = vset.pattern.permute.xlu0 32
          %799 = vperm.xlu0 %798, %v781
          %v800 = vpop.permute.xlu0 %799
          %803 = vset.pattern.permute.xlu0 32
          %804 = vperm.xlu0 %803, %v782
          %v805 = vpop.permute.xlu0 %804
          %808 = vset.pattern.permute.xlu0 32
          %809 = vperm.xlu0 %808, %v783
          %v810 = vpop.permute.xlu0 %809
          %813 = vset.pattern.permute.xlu0 32
          %814 = vperm.xlu0 %813, %v784
          %v815 = vpop.permute.xlu0 %814
          %818 = vset.pattern.permute.xlu0 32
          %819 = vperm.xlu0 %818, %v785
          %v820 = vpop.permute.xlu0 %819
          %823 = vset.pattern.permute.xlu0 32
          %824 = vperm.xlu0 %823, %v786
          %v825 = vpop.permute.xlu0 %824
          %828 = vset.pattern.permute.xlu0 32
          %829 = vperm.xlu0 %828, %v787
          %v830 = vpop.permute.xlu0 %829
          %833 = vset.pattern.permute.xlu0 32
          %834 = vperm.xlu0 %833, %v788
          %v835 = vpop.permute.xlu0 %834
          %838 = vset.pattern.permute.xlu0 32
          %839 = vperm.xlu0 %838, %v789
          %v840 = vpop.permute.xlu0 %839
          %843 = vset.pattern.permute.xlu0 32
          %844 = vperm.xlu0 %843, %v790
          %v845 = vpop.permute.xlu0 %844
          %848 = vset.pattern.permute.xlu0 32
          %849 = vperm.xlu0 %848, %v791
          %v850 = vpop.permute.xlu0 %849
          %853 = vset.pattern.permute.xlu0 32
          %854 = vperm.xlu0 %853, %v792
          %v855 = vpop.permute.xlu0 %854
          %858 = vset.pattern.permute.xlu0 32
          %859 = vperm.xlu0 %858, %v793
          %v860 = vpop.permute.xlu0 %859
          %863 = vset.pattern.permute.xlu0 32
          %864 = vperm.xlu0 %863, %v794
          %v865 = vpop.permute.xlu0 %864
          %868 = vset.pattern.permute.xlu0 32
          %869 = vperm.xlu0 %868, %v795
          %v870 = vpop.permute.xlu0 %869
          %873 = vset.pattern.permute.xlu0 32
          %874 = vperm.xlu0 %873, %v796
          %v875 = vpop.permute.xlu0 %874
          %v877 = vmul.f32 %v749, %v800
          %v878 = vmul.f32 %v750, %v805
          %v879 = vmul.f32 %v751, %v810
          %v880 = vmul.f32 %v752, %v815
          %v881 = vmul.f32 %v753, %v820
          %v882 = vmul.f32 %v754, %v825
          %v883 = vmul.f32 %v755, %v830
          %v884 = vmul.f32 %v756, %v835
          %v885 = vmul.f32 %v757, %v840
          %v886 = vmul.f32 %v758, %v845
          %v887 = vmul.f32 %v759, %v850
          %v888 = vmul.f32 %v760, %v855
          %v889 = vmul.f32 %v761, %v860
          %v890 = vmul.f32 %v762, %v865
          %v891 = vmul.f32 %v763, %v870
          %v892 = vmul.f32 %v764, %v875
          %s893 = sld [smem:[#allocation3]]
          %s894 = sadd.f32 %s893, 1.0
          %v895 = vld [vmem:[%s396] sm:$0xf]
          %v896 = vld [vmem:[%s396 + $0x4] sm:$0xf]
          %v897 = vld [vmem:[%s396 + $0x8] sm:$0xf]
          %v898 = vld [vmem:[%s396 + $0xc] sm:$0xf]
          %v899 = vld [vmem:[%s396 + $0x10] sm:$0xf]
          %v900 = vld [vmem:[%s396 + $0x14] sm:$0xf]
          %v901 = vld [vmem:[%s396 + $0x18] sm:$0xf]
          %v902 = vld [vmem:[%s396 + $0x1c] sm:$0xf]
          %v903 = vld [vmem:[%s396 + $0x20] sm:$0xf]
          %v904 = vld [vmem:[%s396 + $0x24] sm:$0xf]
          %v905 = vld [vmem:[%s396 + $0x28] sm:$0xf]
          %v906 = vld [vmem:[%s396 + $0x2c] sm:$0xf]
          %v907 = vld [vmem:[%s396 + $0x30] sm:$0xf]
          %v908 = vld [vmem:[%s396 + $0x34] sm:$0xf]
          %v909 = vld [vmem:[%s396 + $0x38] sm:$0xf]
          %v910 = vld [vmem:[%s396 + $0x3c] sm:$0xf]
          %v911 = vunpack.c.l.bf16 %v895
          %v912 = vunpack.c.l.bf16 %v896
          %v913 = vunpack.c.l.bf16 %v897
          %v914 = vunpack.c.l.bf16 %v898
          %v915 = vunpack.c.l.bf16 %v899
          %v916 = vunpack.c.l.bf16 %v900
          %v917 = vunpack.c.l.bf16 %v901
          %v918 = vunpack.c.l.bf16 %v902
          %v919 = vunpack.c.l.bf16 %v903
          %v920 = vunpack.c.l.bf16 %v904
          %v921 = vunpack.c.l.bf16 %v905
          %v922 = vunpack.c.l.bf16 %v906
          %v923 = vunpack.c.l.bf16 %v907
          %v924 = vunpack.c.l.bf16 %v908
          %v925 = vunpack.c.l.bf16 %v909
          %v926 = vunpack.c.l.bf16 %v910
          %v927 = vstv %s894
          %v928 = vmul.f32 %v927, %v911
          %v929 = vmul.f32 %v927, %v912
          %v930 = vmul.f32 %v927, %v913
          %v931 = vmul.f32 %v927, %v914
          %v932 = vmul.f32 %v927, %v915
          %v933 = vmul.f32 %v927, %v916
          %v934 = vmul.f32 %v927, %v917
          %v935 = vmul.f32 %v927, %v918
          %v936 = vmul.f32 %v927, %v919
          %v937 = vmul.f32 %v927, %v920
          %v938 = vmul.f32 %v927, %v921
          %v939 = vmul.f32 %v927, %v922
          %v940 = vmul.f32 %v927, %v923
          %v941 = vmul.f32 %v927, %v924
          %v942 = vmul.f32 %v927, %v925
          %v943 = vmul.f32 %v927, %v926
          %v944 = vadd.f32 %v928, %v877
          %v945 = vadd.f32 %v929, %v878
          %v946 = vadd.f32 %v930, %v879
          %v947 = vadd.f32 %v931, %v880
          %v948 = vadd.f32 %v932, %v881
          %v949 = vadd.f32 %v933, %v882
          %v950 = vadd.f32 %v934, %v883
          %v951 = vadd.f32 %v935, %v884
          %v952 = vadd.f32 %v936, %v885
          %v953 = vadd.f32 %v937, %v886
          %v954 = vadd.f32 %v938, %v887
          %v955 = vadd.f32 %v939, %v888
          %v956 = vadd.f32 %v940, %v889
          %v957 = vadd.f32 %v941, %v890
          %v958 = vadd.f32 %v942, %v891
          %v959 = vadd.f32 %v943, %v892
          %v960 = vpack.c.bf16 %v945, %v944
          %v961 = vpack.c.bf16 %v947, %v946
          %v962 = vpack.c.bf16 %v949, %v948
          %v963 = vpack.c.bf16 %v951, %v950
          %v964 = vpack.c.bf16 %v953, %v952
          %v965 = vpack.c.bf16 %v955, %v954
          %v966 = vpack.c.bf16 %v957, %v956
          %v967 = vpack.c.bf16 %v959, %v958
          %v968 = vld [vmem:[#allocation10] sm:$0xf]
          %v969 = vld [vmem:[#allocation10 + $0x4] sm:$0xf]
          %v970 = vld [vmem:[#allocation10 + $0x8] sm:$0xf]
          %v971 = vld [vmem:[#allocation10 + $0xc] sm:$0xf]
          %v972 = vld [vmem:[#allocation10 + $0x10] sm:$0xf]
          %v973 = vld [vmem:[#allocation10 + $0x14] sm:$0xf]
          %v974 = vld [vmem:[#allocation10 + $0x18] sm:$0xf]
          %v975 = vld [vmem:[#allocation10 + $0x1c] sm:$0xf]
          %v976 = vld [vmem:[#allocation10 + $0x20] sm:$0xf]
          %v977 = vld [vmem:[#allocation10 + $0x24] sm:$0xf]
          %v978 = vld [vmem:[#allocation10 + $0x28] sm:$0xf]
          %v979 = vld [vmem:[#allocation10 + $0x2c] sm:$0xf]
          %v980 = vld [vmem:[#allocation10 + $0x30] sm:$0xf]
          %v981 = vld [vmem:[#allocation10 + $0x34] sm:$0xf]
          %v982 = vld [vmem:[#allocation10 + $0x38] sm:$0xf]
          %v983 = vld [vmem:[#allocation10 + $0x3c] sm:$0xf]
          %v984 = vld [vmem:[%s5] sm:$0x1]
          %v986 = vlaneseq
          %v987 = vshrl.u32 %v986, 7
          %v988 = vsub.s32 0, %v987
          %v989 = vrot.slane %v984, %v988
          %v1007 = vunpack.c.l.b16 %v968
          %v1008 = vunpack.c.l.b16 %v969
          %v1009 = vunpack.c.l.b16 %v970
          %v1010 = vunpack.c.l.b16 %v971
          %v1011 = vunpack.c.l.b16 %v972
          %v1012 = vunpack.c.l.b16 %v973
          %v1013 = vunpack.c.l.b16 %v974
          %v1014 = vunpack.c.l.b16 %v975
          %v1015 = vunpack.c.l.b16 %v976
          %v1016 = vunpack.c.l.b16 %v977
          %v1017 = vunpack.c.l.b16 %v978
          %v1018 = vunpack.c.l.b16 %v979
          %v1019 = vunpack.c.l.b16 %v980
          %v1020 = vunpack.c.l.b16 %v981
          %v1021 = vunpack.c.l.b16 %v982
          %v1022 = vunpack.c.l.b16 %v983
          %v1023 = vpack.c.b16 %v1008, %v1007
          %v1024 = vpack.c.b16 %v1010, %v1009
          %v1025 = vpack.c.b16 %v1012, %v1011
          %v1026 = vpack.c.b16 %v1014, %v1013
          %v1027 = vpack.c.b16 %v1016, %v1015
          %v1028 = vpack.c.b16 %v1018, %v1017
          %v1029 = vpack.c.b16 %v1020, %v1019
          %v1030 = vpack.c.b16 %v1022, %v1021
          %1039 = vmatprep.subr.bf16.mxu0 0
          %1040 = vmatpush1.bf16.msra.mxu0 %v1023
          %1041 = vmatprep.subr.bf16.mxu0 0
          %1042 = vmatpush1.bf16.msra.mxu0 %v1024
          %1043 = vmatprep.subr.bf16.mxu0 0
          %1044 = vmatpush1.bf16.msra.mxu0 %v1025
          %1045 = vmatprep.subr.bf16.mxu0 0
          %1046 = vmatpush1.bf16.msra.mxu0 %v1026
          %1047 = vmatprep.subr.bf16.mxu0 0
          %1048 = vmatpush1.bf16.msra.mxu0 %v1027
          %1049 = vmatprep.subr.bf16.mxu0 0
          %1050 = vmatpush1.bf16.msra.mxu0 %v1028
          %1051 = vmatprep.subr.bf16.mxu0 0
          %1052 = vmatpush1.bf16.msra.mxu0 %v1029
          %1053 = vmatprep.subr.bf16.mxu0 0
          %1054 = vmatpush1.bf16.msra.mxu0 %v1030
          %1055 = vmatprep.subr.bf16.mxu0 0
          %1056 = vmatpush1.bf16.msra.mxu0 0
          %1057 = vmatprep.subr.bf16.mxu0 0
          %1058 = vmatpush1.bf16.msra.mxu0 0
          %1059 = vmatprep.subr.bf16.mxu0 0
          %1060 = vmatpush1.bf16.msra.mxu0 0
          %1061 = vmatprep.subr.bf16.mxu0 0
          %1062 = vmatpush1.bf16.msra.mxu0 0
          %1063 = vmatprep.subr.bf16.mxu0 0
          %1064 = vmatpush1.bf16.msra.mxu0 0
          %1065 = vmatprep.subr.bf16.mxu0 0
          %1066 = vmatpush1.bf16.msra.mxu0 0
          %1067 = vmatprep.subr.bf16.mxu0 0
          %1068 = vmatpush1.bf16.msra.mxu0 0
          %1069 = vmatprep.subr.bf16.mxu0 0
          %1070 = vmatpush1.bf16.msra.mxu0 0
          %1071 = vmatprep.mubr.bf16.mxu0 0
          %1072 = vmatmul.mubr.bf16.gmra.mrb[0].mxu0 %v960
          %v1073 = vpop.f32.mrb[0].mxu0
          %v1074 = vadd.f32 %v989, %v1073
          %v1075 = vpop.f32.mrb[0].mxu0
          %v1076 = vpop.f32.mrb[0].mxu0
          %v1077 = vadd.f32 %v989, %v1076
          %v1078 = vpop.f32.mrb[0].mxu0
          %1079 = vmatprep.mubr.bf16.mxu0 0
          %1080 = vmatmul.mubr.bf16.gmra.mrb[0].mxu0 %v961
          %v1081 = vpop.f32.mrb[0].mxu0
          %v1082 = vadd.f32 %v989, %v1081
          %v1083 = vpop.f32.mrb[0].mxu0
          %v1084 = vpop.f32.mrb[0].mxu0
          %v1085 = vadd.f32 %v989, %v1084
          %v1086 = vpop.f32.mrb[0].mxu0
          %1087 = vmatprep.mubr.bf16.mxu0 0
          %1088 = vmatmul.mubr.bf16.gmra.mrb[0].mxu0 %v962
          %v1089 = vpop.f32.mrb[0].mxu0
          %v1090 = vadd.f32 %v989, %v1089
          %v1091 = vpop.f32.mrb[0].mxu0
          %v1092 = vpop.f32.mrb[0].mxu0
          %v1093 = vadd.f32 %v989, %v1092
          %v1094 = vpop.f32.mrb[0].mxu0
          %1095 = vmatprep.mubr.bf16.mxu0 0
          %1096 = vmatmul.mubr.bf16.gmra.mrb[0].mxu0 %v963
          %v1097 = vpop.f32.mrb[0].mxu0
          %v1098 = vadd.f32 %v989, %v1097
          %v1099 = vpop.f32.mrb[0].mxu0
          %v1100 = vpop.f32.mrb[0].mxu0
          %v1101 = vadd.f32 %v989, %v1100
          %v1102 = vpop.f32.mrb[0].mxu0
          %1103 = vmatprep.mubr.bf16.mxu0 0
          %1104 = vmatmul.mubr.bf16.gmra.mrb[0].mxu0 %v964
          %v1105 = vpop.f32.mrb[0].mxu0
          %v1106 = vadd.f32 %v989, %v1105
          %v1107 = vpop.f32.mrb[0].mxu0
          %v1108 = vpop.f32.mrb[0].mxu0
          %v1109 = vadd.f32 %v989, %v1108
          %v1110 = vpop.f32.mrb[0].mxu0
          %1111 = vmatprep.mubr.bf16.mxu0 0
          %1112 = vmatmul.mubr.bf16.gmra.mrb[0].mxu0 %v965
          %v1113 = vpop.f32.mrb[0].mxu0
          %v1114 = vadd.f32 %v989, %v1113
          %v1115 = vpop.f32.mrb[0].mxu0
          %v1116 = vpop.f32.mrb[0].mxu0
          %v1117 = vadd.f32 %v989, %v1116
          %v1118 = vpop.f32.mrb[0].mxu0
          %1119 = vmatprep.mubr.bf16.mxu0 0
          %1120 = vmatmul.mubr.bf16.gmra.mrb[0].mxu0 %v966
          %v1121 = vpop.f32.mrb[0].mxu0
          %v1122 = vadd.f32 %v989, %v1121
          %v1123 = vpop.f32.mrb[0].mxu0
          %v1124 = vpop.f32.mrb[0].mxu0
          %v1125 = vadd.f32 %v989, %v1124
          %v1126 = vpop.f32.mrb[0].mxu0
          %1127 = vmatprep.mubr.bf16.mxu0 0
          %1128 = vmatmul.mubr.bf16.gmra.mrb[0].mxu0 %v967
          %v1129 = vpop.f32.mrb[0].mxu0
          %v1130 = vadd.f32 %v989, %v1129
          %v1131 = vpop.f32.mrb[0].mxu0
          %v1132 = vpop.f32.mrb[0].mxu0
          %v1133 = vadd.f32 %v989, %v1132
          %v1134 = vpop.f32.mrb[0].mxu0
          %1135 = vdwg.mxu0
          %v1136 = vmax.f32 %v1074, 0.0
          %v1137 = vmax.f32 %v1077, 0.0
          %v1138 = vmax.f32 %v1082, 0.0
          %v1139 = vmax.f32 %v1085, 0.0
          %v1140 = vmax.f32 %v1090, 0.0
          %v1141 = vmax.f32 %v1093, 0.0
          %v1142 = vmax.f32 %v1098, 0.0
          %v1143 = vmax.f32 %v1101, 0.0
          %v1144 = vmax.f32 %v1106, 0.0
          %v1145 = vmax.f32 %v1109, 0.0
          %v1146 = vmax.f32 %v1114, 0.0
          %v1147 = vmax.f32 %v1117, 0.0
          %v1148 = vmax.f32 %v1122, 0.0
          %v1149 = vmax.f32 %v1125, 0.0
          %v1150 = vmax.f32 %v1130, 0.0
          %v1151 = vmax.f32 %v1133, 0.0
          %v1152 = vpack.c.bf16 %v1137, %v1136
          %v1153 = vpack.c.bf16 %v1139, %v1138
          %v1154 = vpack.c.bf16 %v1141, %v1140
          %v1155 = vpack.c.bf16 %v1143, %v1142
          %v1156 = vpack.c.bf16 %v1145, %v1144
          %v1157 = vpack.c.bf16 %v1147, %v1146
          %v1158 = vpack.c.bf16 %v1149, %v1148
          %v1159 = vpack.c.bf16 %v1151, %v1150
          %v1160 = vld [vmem:[#allocation12] sm:$0xf]
          %v1161 = vld [vmem:[#allocation12 + $0x4] sm:$0xf]
          %v1162 = vld [vmem:[#allocation12 + $0x8] sm:$0xf]
          %v1163 = vld [vmem:[#allocation12 + $0xc] sm:$0xf]
          %v1164 = vld [vmem:[#allocation12 + $0x10] sm:$0xf]
          %v1165 = vld [vmem:[#allocation12 + $0x14] sm:$0xf]
          %v1166 = vld [vmem:[#allocation12 + $0x18] sm:$0xf]
          %v1167 = vld [vmem:[#allocation12 + $0x1c] sm:$0xf]
          %v1168 = vld [vmem:[#allocation12 + $0x20] sm:$0xf]
          %v1169 = vld [vmem:[#allocation12 + $0x24] sm:$0xf]
          %v1170 = vld [vmem:[#allocation12 + $0x28] sm:$0xf]
          %v1171 = vld [vmem:[#allocation12 + $0x2c] sm:$0xf]
          %v1172 = vld [vmem:[#allocation12 + $0x30] sm:$0xf]
          %v1173 = vld [vmem:[#allocation12 + $0x34] sm:$0xf]
          %v1174 = vld [vmem:[#allocation12 + $0x38] sm:$0xf]
          %v1175 = vld [vmem:[#allocation12 + $0x3c] sm:$0xf]
          %v1176 = vld [vmem:[%s7] sm:$0x1]
          %v1178 = vlaneseq
          %v1179 = vshrl.u32 %v1178, 7
          %v1180 = vsub.s32 0, %v1179
          %v1181 = vrot.slane %v1176, %v1180
          %v1199 = vunpack.c.l.b16 %v1160
          %v1200 = vunpack.c.l.b16 %v1161
          %v1201 = vunpack.c.l.b16 %v1162
          %v1202 = vunpack.c.l.b16 %v1163
          %v1203 = vunpack.c.l.b16 %v1164
          %v1204 = vunpack.c.l.b16 %v1165
          %v1205 = vunpack.c.l.b16 %v1166
          %v1206 = vunpack.c.l.b16 %v1167
          %v1207 = vunpack.c.l.b16 %v1168
          %v1208 = vunpack.c.l.b16 %v1169
          %v1209 = vunpack.c.l.b16 %v1170
          %v1210 = vunpack.c.l.b16 %v1171
          %v1211 = vunpack.c.l.b16 %v1172
          %v1212 = vunpack.c.l.b16 %v1173
          %v1213 = vunpack.c.l.b16 %v1174
          %v1214 = vunpack.c.l.b16 %v1175
          %v1215 = vpack.c.b16 %v1200, %v1199
          %v1216 = vpack.c.b16 %v1202, %v1201
          %v1217 = vpack.c.b16 %v1204, %v1203
          %v1218 = vpack.c.b16 %v1206, %v1205
          %v1219 = vpack.c.b16 %v1208, %v1207
          %v1220 = vpack.c.b16 %v1210, %v1209
          %v1221 = vpack.c.b16 %v1212, %v1211
          %v1222 = vpack.c.b16 %v1214, %v1213
          %1231 = vmatprep.subr.bf16.mxu0 0
          %1232 = vmatpush1.bf16.msra.mxu0 %v1215
          %1233 = vmatprep.subr.bf16.mxu0 0
          %1234 = vmatpush1.bf16.msra.mxu0 %v1216
          %1235 = vmatprep.subr.bf16.mxu0 0
          %1236 = vmatpush1.bf16.msra.mxu0 %v1217
          %1237 = vmatprep.subr.bf16.mxu0 0
          %1238 = vmatpush1.bf16.msra.mxu0 %v1218
          %1239 = vmatprep.subr.bf16.mxu0 0
          %1240 = vmatpush1.bf16.msra.mxu0 %v1219
          %1241 = vmatprep.subr.bf16.mxu0 0
          %1242 = vmatpush1.bf16.msra.mxu0 %v1220
          %1243 = vmatprep.subr.bf16.mxu0 0
          %1244 = vmatpush1.bf16.msra.mxu0 %v1221
          %1245 = vmatprep.subr.bf16.mxu0 0
          %1246 = vmatpush1.bf16.msra.mxu0 %v1222
          %1247 = vmatprep.subr.bf16.mxu0 0
          %1248 = vmatpush1.bf16.msra.mxu0 0
          %1249 = vmatprep.subr.bf16.mxu0 0
          %1250 = vmatpush1.bf16.msra.mxu0 0
          %1251 = vmatprep.subr.bf16.mxu0 0
          %1252 = vmatpush1.bf16.msra.mxu0 0
          %1253 = vmatprep.subr.bf16.mxu0 0
          %1254 = vmatpush1.bf16.msra.mxu0 0
          %1255 = vmatprep.subr.bf16.mxu0 0
          %1256 = vmatpush1.bf16.msra.mxu0 0
          %1257 = vmatprep.subr.bf16.mxu0 0
          %1258 = vmatpush1.bf16.msra.mxu0 0
          %1259 = vmatprep.subr.bf16.mxu0 0
          %1260 = vmatpush1.bf16.msra.mxu0 0
          %1261 = vmatprep.subr.bf16.mxu0 0
          %1262 = vmatpush1.bf16.msra.mxu0 0
          %1263 = vmatprep.mubr.bf16.mxu0 0
          %1264 = vmatmul.mubr.bf16.gmra.mrb[0].mxu0 %v1152
          %v1265 = vpop.f32.mrb[0].mxu0
          %v1266 = vadd.f32 %v1181, %v1265
          %v1267 = vpop.f32.mrb[0].mxu0
          %v1268 = vpop.f32.mrb[0].mxu0
          %v1269 = vadd.f32 %v1181, %v1268
          %v1270 = vpop.f32.mrb[0].mxu0
          %1271 = vmatprep.mubr.bf16.mxu0 0
          %1272 = vmatmul.mubr.bf16.gmra.mrb[0].mxu0 %v1153
          %v1273 = vpop.f32.mrb[0].mxu0
          %v1274 = vadd.f32 %v1181, %v1273
          %v1275 = vpop.f32.mrb[0].mxu0
          %v1276 = vpop.f32.mrb[0].mxu0
          %v1277 = vadd.f32 %v1181, %v1276
          %v1278 = vpop.f32.mrb[0].mxu0
          %1279 = vmatprep.mubr.bf16.mxu0 0
          %1280 = vmatmul.mubr.bf16.gmra.mrb[0].mxu0 %v1154
          %v1281 = vpop.f32.mrb[0].mxu0
          %v1282 = vadd.f32 %v1181, %v1281
          %v1283 = vpop.f32.mrb[0].mxu0
          %v1284 = vpop.f32.mrb[0].mxu0
          %v1285 = vadd.f32 %v1181, %v1284
          %v1286 = vpop.f32.mrb[0].mxu0
          %1287 = vmatprep.mubr.bf16.mxu0 0
          %1288 = vmatmul.mubr.bf16.gmra.mrb[0].mxu0 %v1155
          %v1289 = vpop.f32.mrb[0].mxu0
          %v1290 = vadd.f32 %v1181, %v1289
          %v1291 = vpop.f32.mrb[0].mxu0
          %v1292 = vpop.f32.mrb[0].mxu0
          %v1293 = vadd.f32 %v1181, %v1292
          %v1294 = vpop.f32.mrb[0].mxu0
          %1295 = vmatprep.mubr.bf16.mxu0 0
          %1296 = vmatmul.mubr.bf16.gmra.mrb[0].mxu0 %v1156
          %v1297 = vpop.f32.mrb[0].mxu0
          %v1298 = vadd.f32 %v1181, %v1297
          %v1299 = vpop.f32.mrb[0].mxu0
          %v1300 = vpop.f32.mrb[0].mxu0
          %v1301 = vadd.f32 %v1181, %v1300
          %v1302 = vpop.f32.mrb[0].mxu0
          %1303 = vmatprep.mubr.bf16.mxu0 0
          %1304 = vmatmul.mubr.bf16.gmra.mrb[0].mxu0 %v1157
          %v1305 = vpop.f32.mrb[0].mxu0
          %v1306 = vadd.f32 %v1181, %v1305
          %v1307 = vpop.f32.mrb[0].mxu0
          %v1308 = vpop.f32.mrb[0].mxu0
          %v1309 = vadd.f32 %v1181, %v1308
          %v1310 = vpop.f32.mrb[0].mxu0
          %1311 = vmatprep.mubr.bf16.mxu0 0
          %1312 = vmatmul.mubr.bf16.gmra.mrb[0].mxu0 %v1158
          %v1313 = vpop.f32.mrb[0].mxu0
          %v1314 = vadd.f32 %v1181, %v1313
          %v1315 = vpop.f32.mrb[0].mxu0
          %v1316 = vpop.f32.mrb[0].mxu0
          %v1317 = vadd.f32 %v1181, %v1316
          %v1318 = vpop.f32.mrb[0].mxu0
          %1319 = vmatprep.mubr.bf16.mxu0 0
          %1320 = vmatmul.mubr.bf16.gmra.mrb[0].mxu0 %v1159
          %v1321 = vpop.f32.mrb[0].mxu0
          %v1322 = vadd.f32 %v1181, %v1321
          %v1323 = vpop.f32.mrb[0].mxu0
          %v1324 = vpop.f32.mrb[0].mxu0
          %v1325 = vadd.f32 %v1181, %v1324
          %v1326 = vpop.f32.mrb[0].mxu0
          %1327 = vdwg.mxu0
          %1328 = vst [vmem:[%s446] sm:$0xff] %v1266
          %1329 = vst [vmem:[%s446 + $0x8] sm:$0xff] %v1269
          %1330 = vst [vmem:[%s446 + $0x10] sm:$0xff] %v1274
          %1331 = vst [vmem:[%s446 + $0x18] sm:$0xff] %v1277
          %1332 = vst [vmem:[%s446 + $0x20] sm:$0xff] %v1282
          %1333 = vst [vmem:[%s446 + $0x28] sm:$0xff] %v1285
          %1334 = vst [vmem:[%s446 + $0x30] sm:$0xff] %v1290
          %1335 = vst [vmem:[%s446 + $0x38] sm:$0xff] %v1293
          %1336 = vst [vmem:[%s446 + $0x40] sm:$0xff] %v1298
          %1337 = vst [vmem:[%s446 + $0x48] sm:$0xff] %v1301
          %1338 = vst [vmem:[%s446 + $0x50] sm:$0xff] %v1306
          %1339 = vst [vmem:[%s446 + $0x58] sm:$0xff] %v1309
          %1340 = vst [vmem:[%s446 + $0x60] sm:$0xff] %v1314
          %1341 = vst [vmem:[%s446 + $0x68] sm:$0xff] %v1317
          %1342 = vst [vmem:[%s446 + $0x70] sm:$0xff] %v1322
          %1343 = vst [vmem:[%s446 + $0x78] sm:$0xff] %v1325
        $region80: #{tpu_custom_call.1} parent=51 // pred_fallthru
          _
        %s1344 = sand.u32 %s235, 1
        %s1345 = scalar_lea.sflag [#allocation6], %s1344
        %s1346 = sand.u32 %s235, 1
        %s1347 = smul.addr %s1346, 128
        %s1348 = scalar_lea.vmem [#allocation13], %s1347
        // Predicated region
        $region81: #{tpu_custom_call.1} parent=51 // pred_check
          %p1349 = pneg %p245
        $region82: #{tpu_custom_call.1} parent=51 // pred_check_branch
          %1351 = sbr.rel (%p1349) target = $region84
        $region83: #{tpu_custom_call.1} parent=51 // pred_region
          %s1352 = smul.u32 16, %s34
          %s1354 = ssub.s32 2048, 2048
          %1355 = vsyncadd %s1345, %s1354
          %s1356 = smul.addr %s1352, 128
          %s1357 = scalar_lea.hbm %s8, %s1356
          %s1358 = sshll.u32 %s1348, 4
          %s1359 = int_to_ptr.vmem [resolvable:$true] %s1358
          %1364 = dma.vmem_to_hbm [thread:$0]  %s1359, 2048, %s1357, %s1345, 128, 128, 8
        $region84: #{tpu_custom_call.1} parent=51 // pred_fallthru
          _
      $region52: #{tpu_custom_call.1} parent=5 // pred_fallthru
        _
      %p1365 = scmp.le.s32.totalorder 2, %s25
      // Predicated region
      $region85: #{tpu_custom_call.1} parent=5 // pred_check
        %p1366 = pneg %p1365
      $region86: #{tpu_custom_call.1} parent=5 // pred_check_branch
        %1368 = sbr.rel (%p1366) target = $region88
      $region87: #{tpu_custom_call.1} parent=5 // pred_region
        %s1369 = ssub.s32 %s25, 2
        // Predicated region
        $region89: #{tpu_custom_call.1} parent=87 // pred_check
          %p1370 = pneg %p251
        $region90: #{tpu_custom_call.1} parent=87 // pred_check_branch
          %1372 = sbr.rel (%p1370) target = $region92
        $region91: #{tpu_custom_call.1} parent=87 // pred_region
          %s1373 = sand.u32 %s236, 1
          %s1374 = scalar_lea.sflag [#allocation6], %s1373
          %s1375 = sand.u32 %s236, 1
          %s1376 = smul.addr %s1375, 128
          %s1377 = scalar_lea.vmem [#allocation13], %s1376
          %1378 = dma.done %s1374, 2048
        $region92: #{tpu_custom_call.1} parent=87 // pred_fallthru
          _
      $region88: #{tpu_custom_call.1} parent=5 // pred_fallthru
        _
    $region6: #{tpu_custom_call.1} parent=1 // loop_footer
      %s29 = sadd.s32 1, %s25
    $region7: #{tpu_custom_call.1} parent=1 // loop_footer_branch
      %24 = sbr.rel target = $region3
    $region8: #{tpu_custom_call.1} parent=1 // loop_exit
      _
    %1379 = vsyncpa [#allocation5], 1
    %s1380 = scalar_lea.sflag [#allocation5], 1
    %1381 = vsyncpa %s1380, 1
    %1382 = vsyncpa [#allocation8], 1
    %s1383 = scalar_lea.sflag [#allocation8], 1
    %1384 = vsyncpa %s1383, 1
    %1385 = vsyncpa [#allocation11], 1
    %1386 = vsyncpa [#allocation6], 1
    %s1387 = scalar_lea.sflag [#allocation6], 1
    %1388 = vsyncpa %s1387, 1

</llo_original>
